<compile_context>
chip_gen: v6e
topology: v6e:2x2x1
jax: 0.10.0
libtpu: 0.0.40
codegen_flags: <defaults>
</compile_context>

<pallas_src>
import functools

import numpy as np
import jax
import jax.numpy as jnp
from jax.experimental import pallas as pl
from jax.experimental.pallas import tpu as pltpu

HIDDEN = 64
OUT_C = 2
CPAD = 8           # Cin padded up to one full sublane group


# ---------------------------------------------------------------------------
# Kernel
# ---------------------------------------------------------------------------
def resblock_kernel(x_ref, w1_ref, b1_ref, w2_ref, b2_ref, w3_ref, b3_ref,
                    o_ref, xcol1_ref, xcol2_ref, *, grid_w):
    hw = x_ref.shape[-1]
    w_dim = grid_w

    # Column-boundary masks for the dx wrap fix-up (hoisted, computed once/step).
    col = jax.lax.broadcasted_iota(jnp.int32, (1, hw), 1) % w_dim
    m_first = col == 0
    m_last = col == (w_dim - 1)

    def shift_cols(a, dx):
        # a: (C, HW) -> a[c, h*W + (w+dx) % W] for static dx in {-1, +1}
        base = pltpu.roll(a, shift=(-dx) % hw, axis=1)
        if dx == 1:
            fix = pltpu.roll(a, shift=w_dim - 1, axis=1)       # pulls (h, 0)
            return jnp.where(m_last, fix, base)
        else:  # dx == -1
            fix = pltpu.roll(a, shift=hw - (w_dim - 1), axis=1)  # pulls (h, W-1)
            return jnp.where(m_first, fix, base)

    def conv3x3_circ(a, w_dy_ref, xcol_ref):
        # a: (C, HW) with C a multiple of 8; w_dy_ref: (3, HIDDEN, 3*C).
        # Build the dx-concatenated block ONCE, directly into scratch
        # (no list + concatenate double materialization).
        c_dim = a.shape[0]
        xcol_ref[pl.ds(0, c_dim), :] = shift_cols(a, -1)
        xcol_ref[pl.ds(c_dim, c_dim), :] = a
        xcol_ref[pl.ds(2 * c_dim, c_dim), :] = shift_cols(a, 1)
        xcol = xcol_ref[...]                                     # (3*C, HW)

        # One accumulating matmul per dy; the dy shift is a single roll of the
        # whole block by dy*W (whole rows move intact, so dx/dy commute).
        acc = jnp.dot(w_dy_ref[1], xcol,                          # dy = 0
                      preferred_element_type=jnp.float32)
        acc = acc + jnp.dot(w_dy_ref[0],                          # dy = -1
                            pltpu.roll(xcol, shift=w_dim, axis=1),
                            preferred_element_type=jnp.float32)
        acc = acc + jnp.dot(w_dy_ref[2],                          # dy = +1
                            pltpu.roll(xcol, shift=hw - w_dim, axis=1),
                            preferred_element_type=jnp.float32)
        return acc

    x_b = x_ref[0]                                                # (CPAD, HW)

    # conv1: (2->64, circular 3x3) as three K=24 matmuls on the padded input.
    h1 = jnp.tanh(conv3x3_circ(x_b, w1_ref, xcol1_ref) + b1_ref[...])

    # conv2: (64->64, circular 3x3) as three K=192 matmuls.
    h2 = jnp.tanh(conv3x3_circ(h1, w2_ref, xcol2_ref) + b2_ref[...])

    # conv3: 1x1 (64->2), tanh, residual add (first 2 channels of padded x).
    h3 = jnp.tanh(jnp.dot(w3_ref[...], h2, preferred_element_type=jnp.float32)
                  + b3_ref[...])
    o_ref[0] = h3 + x_b[0:OUT_C, :]                               # lane-dense store


# ---------------------------------------------------------------------------
# Wrapper
# ---------------------------------------------------------------------------
def residual_block_forward(x_nchw, params):
    """x_nchw: (N, 2, H, W) float32, params in PyTorch layout. Returns (N, 2, H, W)."""
    w1, b1, w2, b2, w3, b3 = params
    N, cin, H, Wd = x_nchw.shape
    assert cin == OUT_C, "residual add requires inplanes == 2"
    HW = H * Wd

    # NCHW -> (N, C, H*W), then pad Cin 2 -> 8 so im2col blocks are sublane aligned.
    x = x_nchw.reshape(N, cin, HW)
    x = jnp.pad(x, ((0, 0), (0, CPAD - cin), (0, 0)))

    # Weight layout conversions (PyTorch (Cout, Cin, ky, kx) -> per-dy im2col):
    #   w_dy[ky][o, kx*C + c] = w[o, c, ky, kx]   matching the dx-major xcol layout.
    w1p = jnp.pad(w1, ((0, 0), (0, CPAD - cin), (0, 0), (0, 0)))        # (64, 8, 3, 3)
    w1r = jnp.transpose(w1p, (2, 0, 3, 1)).reshape(3, HIDDEN, 3 * CPAD)   # (3, 64, 24)
    w2r = jnp.transpose(w2, (2, 0, 3, 1)).reshape(3, HIDDEN, 3 * HIDDEN)  # (3, 64, 192)
    w3c = w3.reshape(OUT_C, HIDDEN)
    b1c = b1.reshape(HIDDEN, 1)
    b2c = b2.reshape(HIDDEN, 1)
    b3c = b3.reshape(OUT_C, 1)

    kernel = functools.partial(resblock_kernel, grid_w=Wd)

    out = pl.pallas_call(
        kernel,
        out_shape=jax.ShapeDtypeStruct((N, OUT_C, HW), jnp.float32),
        grid_spec=pltpu.PrefetchScalarGridSpec(
            num_scalar_prefetch=0,
            grid=(N,),                                   # one sample per grid step
            in_specs=[
                pl.BlockSpec((1, CPAD, HW), lambda n: (n, 0, 0)),
                pl.BlockSpec((3, HIDDEN, 3 * CPAD), lambda n: (0, 0, 0)),
                pl.BlockSpec((HIDDEN, 1), lambda n: (0, 0)),
                pl.BlockSpec((3, HIDDEN, 3 * HIDDEN), lambda n: (0, 0, 0)),
                pl.BlockSpec((HIDDEN, 1), lambda n: (0, 0)),
                pl.BlockSpec((OUT_C, HIDDEN), lambda n: (0, 0)),
                pl.BlockSpec((OUT_C, 1), lambda n: (0, 0)),
            ],
            out_specs=pl.BlockSpec((1, OUT_C, HW), lambda n: (n, 0, 0)),
            scratch_shapes=[
                pltpu.VMEM((3 * CPAD, HW), jnp.float32),      # conv1 im2col (24, HW)
                pltpu.VMEM((3 * HIDDEN, HW), jnp.float32),    # conv2 im2col (192, HW)
            ],
        ),
        compiler_params=pltpu.CompilerParams(
            dimension_semantics=("parallel",),
            vmem_limit_bytes=32 * 1024 * 1024),
    )(x, w1r, b1c, w2r, b2c, w3c, b3c)

    return out.reshape(N, OUT_C, H, Wd)


# ---------------------------------------------------------------------------
# Init (PyTorch-layout params) and pure-JAX reference
# ---------------------------------------------------------------------------
def init_params(key, inplanes=2):
    k1, k2, k3 = jax.random.split(key, 3)
    c = 0.5
    bound1 = c * np.sqrt(1.0 / (2 * 64 * 3 * 3))
    bound2 = c * np.sqrt(1.0 / (64 * 64 * 3 * 3))
    bound3 = c * np.sqrt(1.0 / (64 * 2 * 1 * 1))
    w1 = jax.random.uniform(k1, (HIDDEN, inplanes, 3, 3), jnp.float32, -bound1, bound1)
    w2 = jax.random.uniform(k2, (HIDDEN, HIDDEN, 3, 3), jnp.float32, -bound2, bound2)
    w3 = jax.random.uniform(k3, (OUT_C, HIDDEN, 1, 1), jnp.float32, -bound3, bound3)
    b1 = jnp.zeros((HIDDEN,), jnp.float32)
    b2 = jnp.zeros((HIDDEN,), jnp.float32)
    b3 = jnp.zeros((OUT_C,), jnp.float32)
    return (w1, b1, w2, b2, w3, b3)


def reference_forward(x, params):
    # Pure-JAX NCHW reference: circular conv as a sum of rolled inputs.
    w1, b1, w2, b2, w3, b3 = params

    def conv3x3_circ(a, w, bias):
        out = bias[None, :, None, None]
        for dy in (-1, 0, 1):
            for dx in (-1, 0, 1):
                xs = jnp.roll(a, shift=(-dy, -dx), axis=(2, 3))
                out = out + jnp.einsum('nchw,oc->nohw', xs, w[:, :, dy + 1, dx + 1])
        return out

    h1 = jnp.tanh(conv3x3_circ(x, w1, b1))
    h2 = jnp.tanh(conv3x3_circ(h1, w2, b2))
    h3 = jnp.tanh(jnp.einsum('nchw,oc->nohw', h2, w3[:, :, 0, 0])
                  + b3[None, :, None, None])
    return h3 + x


if __name__ == "__main__":
    key = jax.random.PRNGKey(0)
    kx, kp, kb, kx2 = jax.random.split(key, 4)

    N, C, H, W = 2, 2, 16, 16   # inplanes must be 2 for the residual add
    x = jax.random.normal(kx, (N, C, H, W), jnp.float32)
    params = init_params(kp, inplanes=C)

    out = jax.block_until_ready(residual_block_forward(x, params))
    assert out.shape == (N, OUT_C, H, W)
    ref = reference_forward(x, params)
    np.testing.assert_allclose(np.asarray(out), np.asarray(ref), atol=1e-4, rtol=1e-4)

    # Second parity check: larger batch (grid=4) and non-zero biases.
    w1, _, w2, _, w3, _ = params
    kb1, kb2, kb3 = jax.random.split(kb, 3)
    params2 = (w1, 0.1 * jax.random.normal(kb1, (HIDDEN,), jnp.float32),
               w2, 0.1 * jax.random.normal(kb2, (HIDDEN,), jnp.float32),
               w3, 0.1 * jax.random.normal(kb3, (OUT_C,), jnp.float32))
    x2 = jax.random.normal(kx2, (4, C, H, W), jnp.float32)
    out2 = jax.block_until_ready(residual_block_forward(x2, params2))
    np.testing.assert_allclose(np.asarray(out2),
                               np.asarray(reference_forward(x2, params2)),
                               atol=1e-4, rtol=1e-4)

    print("KERNEL_OK")
</pallas_src>

<mosaic_0001>
module attributes {stable_mosaic.version = 11 : i64} {
  func.func @resblock_kernel(%arg0: i32, %arg1: memref<1x8x256xf32, #tpu.memory_space<vmem>>, %arg2: memref<3x64x24xf32, #tpu.memory_space<vmem>>, %arg3: memref<64x1xf32, #tpu.memory_space<vmem>>, %arg4: memref<3x64x192xf32, #tpu.memory_space<vmem>>, %arg5: memref<64x1xf32, #tpu.memory_space<vmem>>, %arg6: memref<2x64xf32, #tpu.memory_space<vmem>>, %arg7: memref<2x1xf32, #tpu.memory_space<vmem>>, %arg8: memref<1x2x256xf32, #tpu.memory_space<vmem>>, %arg9: memref<24x256xf32, #tpu.memory_space<vmem>>, %arg10: memref<192x256xf32, #tpu.memory_space<vmem>>) attributes {dimension_semantics = [#tpu.dimension_semantics<parallel>], iteration_bounds = array<i64: 2>, scalar_prefetch = 0 : i64, scratch_operands = 2 : i64, tpu.core_type = #tpu.core_type<tc>, window_params = [{transform_indices = @transform_0, window_bounds = array<i64: 1, 8, 256>}, {pipeline_mode = #tpu.pipeline_mode<synchronous>, transform_indices = @transform_1, window_bounds = array<i64: 3, 64, 24>}, {pipeline_mode = #tpu.pipeline_mode<synchronous>, transform_indices = @transform_2, window_bounds = array<i64: 64, 1>}, {pipeline_mode = #tpu.pipeline_mode<synchronous>, transform_indices = @transform_3, window_bounds = array<i64: 3, 64, 192>}, {pipeline_mode = #tpu.pipeline_mode<synchronous>, transform_indices = @transform_4, window_bounds = array<i64: 64, 1>}, {pipeline_mode = #tpu.pipeline_mode<synchronous>, transform_indices = @transform_5, window_bounds = array<i64: 2, 64>}, {pipeline_mode = #tpu.pipeline_mode<synchronous>, transform_indices = @transform_6, window_bounds = array<i64: 2, 1>}, {transform_indices = @transform_7, window_bounds = array<i64: 1, 2, 256>}]} {
    %0 = tpu.iota {dimensions = array<i32: 1>} : vector<1x256xi32>
    %c16_i32 = arith.constant 16 : i32
    %c0_i32 = arith.constant 0 : i32
    %1 = arith.cmpi eq, %c16_i32, %c0_i32 : i32
    %c1_i32 = arith.constant 1 : i32
    %2 = arith.select %1, %c1_i32, %c16_i32 : i32
    %3 = vector.broadcast %2 : i32 to vector<1x256xi32>
    %4 = arith.remsi %0, %3 : vector<1x256xi32>
    %c0_i32_0 = arith.constant 0 : i32
    %5 = vector.broadcast %c0_i32_0 : i32 to vector<1x256xi32>
    %6 = arith.cmpi ne, %4, %5 : vector<1x256xi32>
    %c0_i32_1 = arith.constant 0 : i32
    %7 = vector.broadcast %c0_i32_1 : i32 to vector<1x256xi32>
    %8 = arith.cmpi slt, %4, %7 : vector<1x256xi32>
    %c0_i32_2 = arith.constant 0 : i32
    %9 = arith.cmpi slt, %2, %c0_i32_2 : i32
    %10 = vector.broadcast %9 : i1 to vector<1x256xi1>
    %11 = vector.broadcast %10 : vector<1x256xi1> to vector<1x256xi1>
    %12 = arith.xori %8, %11 : vector<1x256xi1>
    %13 = arith.andi %12, %6 : vector<1x256xi1>
    %14 = vector.broadcast %2 : i32 to vector<1x256xi32>
    %15 = arith.addi %4, %14 : vector<1x256xi32>
    %16 = arith.select %13, %15, %4 : vector<1x256xi1>, vector<1x256xi32>
    %c0_i32_3 = arith.constant 0 : i32
    %17 = vector.broadcast %c0_i32_3 : i32 to vector<1x256xi32>
    %18 = arith.cmpi eq, %16, %17 : vector<1x256xi32>
    %c15_i32 = arith.constant 15 : i32
    %19 = vector.broadcast %c15_i32 : i32 to vector<1x256xi32>
    %20 = arith.cmpi eq, %16, %19 : vector<1x256xi32>
    %c0 = arith.constant 0 : index
    %c0_4 = arith.constant 0 : index
    %c0_5 = arith.constant 0 : index
    %21 = vector.load %arg1[%c0, %c0_4, %c0_5] : memref<1x8x256xf32, #tpu.memory_space<vmem>>, vector<1x8x256xf32>
    %22 = vector.shape_cast %21 : vector<1x8x256xf32> to vector<8x256xf32>
    %c1_i32_6 = arith.constant 1 : i32
    %23 = tpu.dynamic_rotate %22 by %c1_i32_6 dim 1 : vector<8x256xf32>, i32 -> vector<8x256xf32>
    %c241_i32 = arith.constant 241 : i32
    %24 = tpu.dynamic_rotate %22 by %c241_i32 dim 1 : vector<8x256xf32>, i32 -> vector<8x256xf32>
    %25 = vector.shape_cast %18 : vector<1x256xi1> to vector<1x256xi1>
    %26 = vector.broadcast %25 : vector<1x256xi1> to vector<8x256xi1>
    %27 = arith.select %26, %24, %23 : vector<8x256xi1>, vector<8x256xf32>
    %c0_7 = arith.constant 0 : index
    %c0_8 = arith.constant 0 : index
    %28 = vector.load %arg9[%c0_7, %c0_8] : memref<24x256xf32, #tpu.memory_space<vmem>>, vector<8x256xf32>
    tpu.vector_store %arg9[%c0_7, %c0_8], %27 {strides = array<i32>} : memref<24x256xf32, #tpu.memory_space<vmem>>, vector<8x256xf32>,
    %c8 = arith.constant 8 : index
    %c0_9 = arith.constant 0 : index
    %29 = vector.load %arg9[%c8, %c0_9] : memref<24x256xf32, #tpu.memory_space<vmem>>, vector<8x256xf32>
    tpu.vector_store %arg9[%c8, %c0_9], %22 {strides = array<i32>} : memref<24x256xf32, #tpu.memory_space<vmem>>, vector<8x256xf32>,
    %c255_i32 = arith.constant 255 : i32
    %30 = tpu.dynamic_rotate %22 by %c255_i32 dim 1 : vector<8x256xf32>, i32 -> vector<8x256xf32>
    %c15_i32_10 = arith.constant 15 : i32
    %31 = tpu.dynamic_rotate %22 by %c15_i32_10 dim 1 : vector<8x256xf32>, i32 -> vector<8x256xf32>
    %32 = vector.shape_cast %20 : vector<1x256xi1> to vector<1x256xi1>
    %33 = vector.broadcast %32 : vector<1x256xi1> to vector<8x256xi1>
    %34 = arith.select %33, %31, %30 : vector<8x256xi1>, vector<8x256xf32>
    %c16 = arith.constant 16 : index
    %c0_11 = arith.constant 0 : index
    %35 = vector.load %arg9[%c16, %c0_11] : memref<24x256xf32, #tpu.memory_space<vmem>>, vector<8x256xf32>
    tpu.vector_store %arg9[%c16, %c0_11], %34 {strides = array<i32>} : memref<24x256xf32, #tpu.memory_space<vmem>>, vector<8x256xf32>,
    %c0_12 = arith.constant 0 : index
    %c0_13 = arith.constant 0 : index
    %36 = vector.load %arg9[%c0_12, %c0_13] : memref<24x256xf32, #tpu.memory_space<vmem>>, vector<24x256xf32>
    %c1 = arith.constant 1 : index
    %c0_14 = arith.constant 0 : index
    %c0_15 = arith.constant 0 : index
    %37 = vector.load %arg2[%c1, %c0_14, %c0_15] : memref<3x64x24xf32, #tpu.memory_space<vmem>>, vector<1x64x24xf32>
    %38 = vector.shape_cast %37 : vector<1x64x24xf32> to vector<64x24xf32>
    %cst = arith.constant dense<0.000000e+00> : vector<64x256xf32>
    %39 = tpu.matmul %38, %36, %cst {dimension_numbers = #tpu.dot_dimension_numbers<[1], [0], [0], [1], [0, 0, 1, 1], [], []>} : vector<64x24xf32>, vector<24x256xf32>, vector<64x256xf32> -> vector<64x256xf32>
    %c0_16 = arith.constant 0 : index
    %c0_17 = arith.constant 0 : index
    %c0_18 = arith.constant 0 : index
    %40 = vector.load %arg2[%c0_16, %c0_17, %c0_18] : memref<3x64x24xf32, #tpu.memory_space<vmem>>, vector<1x64x24xf32>
    %41 = vector.shape_cast %40 : vector<1x64x24xf32> to vector<64x24xf32>
    %c16_i32_19 = arith.constant 16 : i32
    %42 = tpu.dynamic_rotate %36 by %c16_i32_19 dim 1 : vector<24x256xf32>, i32 -> vector<24x256xf32>
    %cst_20 = arith.constant dense<0.000000e+00> : vector<64x256xf32>
    %43 = tpu.matmul %41, %42, %cst_20 {dimension_numbers = #tpu.dot_dimension_numbers<[1], [0], [0], [1], [0, 0, 1, 1], [], []>} : vector<64x24xf32>, vector<24x256xf32>, vector<64x256xf32> -> vector<64x256xf32>
    %44 = arith.addf %39, %43 : vector<64x256xf32>
    %c2 = arith.constant 2 : index
    %c0_21 = arith.constant 0 : index
    %c0_22 = arith.constant 0 : index
    %45 = vector.load %arg2[%c2, %c0_21, %c0_22] : memref<3x64x24xf32, #tpu.memory_space<vmem>>, vector<1x64x24xf32>
    %46 = vector.shape_cast %45 : vector<1x64x24xf32> to vector<64x24xf32>
    %c240_i32 = arith.constant 240 : i32
    %47 = tpu.dynamic_rotate %36 by %c240_i32 dim 1 : vector<24x256xf32>, i32 -> vector<24x256xf32>
    %cst_23 = arith.constant dense<0.000000e+00> : vector<64x256xf32>
    %48 = tpu.matmul %46, %47, %cst_23 {dimension_numbers = #tpu.dot_dimension_numbers<[1], [0], [0], [1], [0, 0, 1, 1], [], []>} : vector<64x24xf32>, vector<24x256xf32>, vector<64x256xf32> -> vector<64x256xf32>
    %49 = arith.addf %44, %48 : vector<64x256xf32>
    %c0_24 = arith.constant 0 : index
    %c0_25 = arith.constant 0 : index
    %50 = vector.load %arg3[%c0_24, %c0_25] : memref<64x1xf32, #tpu.memory_space<vmem>>, vector<64x1xf32>
    %51 = vector.broadcast %50 : vector<64x1xf32> to vector<64x256xf32>
    %52 = arith.addf %49, %51 : vector<64x256xf32>
    %53 = math.tanh %52 : vector<64x256xf32>
    %c1_i32_26 = arith.constant 1 : i32
    %54 = tpu.dynamic_rotate %53 by %c1_i32_26 dim 1 : vector<64x256xf32>, i32 -> vector<64x256xf32>
    %c241_i32_27 = arith.constant 241 : i32
    %55 = tpu.dynamic_rotate %53 by %c241_i32_27 dim 1 : vector<64x256xf32>, i32 -> vector<64x256xf32>
    %56 = vector.shape_cast %18 : vector<1x256xi1> to vector<1x256xi1>
    %57 = vector.broadcast %56 : vector<1x256xi1> to vector<64x256xi1>
    %58 = arith.select %57, %55, %54 : vector<64x256xi1>, vector<64x256xf32>
    %c0_28 = arith.constant 0 : index
    %c0_29 = arith.constant 0 : index
    %59 = vector.load %arg10[%c0_28, %c0_29] : memref<192x256xf32, #tpu.memory_space<vmem>>, vector<64x256xf32>
    tpu.vector_store %arg10[%c0_28, %c0_29], %58 {strides = array<i32>} : memref<192x256xf32, #tpu.memory_space<vmem>>, vector<64x256xf32>,
    %c64 = arith.constant 64 : index
    %c0_30 = arith.constant 0 : index
    %60 = vector.load %arg10[%c64, %c0_30] : memref<192x256xf32, #tpu.memory_space<vmem>>, vector<64x256xf32>
    tpu.vector_store %arg10[%c64, %c0_30], %53 {strides = array<i32>} : memref<192x256xf32, #tpu.memory_space<vmem>>, vector<64x256xf32>,
    %c255_i32_31 = arith.constant 255 : i32
    %61 = tpu.dynamic_rotate %53 by %c255_i32_31 dim 1 : vector<64x256xf32>, i32 -> vector<64x256xf32>
    %c15_i32_32 = arith.constant 15 : i32
    %62 = tpu.dynamic_rotate %53 by %c15_i32_32 dim 1 : vector<64x256xf32>, i32 -> vector<64x256xf32>
    %63 = vector.shape_cast %20 : vector<1x256xi1> to vector<1x256xi1>
    %64 = vector.broadcast %63 : vector<1x256xi1> to vector<64x256xi1>
    %65 = arith.select %64, %62, %61 : vector<64x256xi1>, vector<64x256xf32>
    %c128 = arith.constant 128 : index
    %c0_33 = arith.constant 0 : index
    %66 = vector.load %arg10[%c128, %c0_33] : memref<192x256xf32, #tpu.memory_space<vmem>>, vector<64x256xf32>
    tpu.vector_store %arg10[%c128, %c0_33], %65 {strides = array<i32>} : memref<192x256xf32, #tpu.memory_space<vmem>>, vector<64x256xf32>,
    %c0_34 = arith.constant 0 : index
    %c0_35 = arith.constant 0 : index
    %67 = vector.load %arg10[%c0_34, %c0_35] : memref<192x256xf32, #tpu.memory_space<vmem>>, vector<192x256xf32>
    %c1_36 = arith.constant 1 : index
    %c0_37 = arith.constant 0 : index
    %c0_38 = arith.constant 0 : index
    %68 = vector.load %arg4[%c1_36, %c0_37, %c0_38] : memref<3x64x192xf32, #tpu.memory_space<vmem>>, vector<1x64x192xf32>
    %69 = vector.shape_cast %68 : vector<1x64x192xf32> to vector<64x192xf32>
    %cst_39 = arith.constant dense<0.000000e+00> : vector<64x256xf32>
    %70 = tpu.matmul %69, %67, %cst_39 {dimension_numbers = #tpu.dot_dimension_numbers<[1], [0], [0], [1], [0, 0, 1, 1], [], []>} : vector<64x192xf32>, vector<192x256xf32>, vector<64x256xf32> -> vector<64x256xf32>
    %c0_40 = arith.constant 0 : index
    %c0_41 = arith.constant 0 : index
    %c0_42 = arith.constant 0 : index
    %71 = vector.load %arg4[%c0_40, %c0_41, %c0_42] : memref<3x64x192xf32, #tpu.memory_space<vmem>>, vector<1x64x192xf32>
    %72 = vector.shape_cast %71 : vector<1x64x192xf32> to vector<64x192xf32>
    %c16_i32_43 = arith.constant 16 : i32
    %73 = tpu.dynamic_rotate %67 by %c16_i32_43 dim 1 : vector<192x256xf32>, i32 -> vector<192x256xf32>
    %cst_44 = arith.constant dense<0.000000e+00> : vector<64x256xf32>
    %74 = tpu.matmul %72, %73, %cst_44 {dimension_numbers = #tpu.dot_dimension_numbers<[1], [0], [0], [1], [0, 0, 1, 1], [], []>} : vector<64x192xf32>, vector<192x256xf32>, vector<64x256xf32> -> vector<64x256xf32>
    %75 = arith.addf %70, %74 : vector<64x256xf32>
    %c2_45 = arith.constant 2 : index
    %c0_46 = arith.constant 0 : index
    %c0_47 = arith.constant 0 : index
    %76 = vector.load %arg4[%c2_45, %c0_46, %c0_47] : memref<3x64x192xf32, #tpu.memory_space<vmem>>, vector<1x64x192xf32>
    %77 = vector.shape_cast %76 : vector<1x64x192xf32> to vector<64x192xf32>
    %c240_i32_48 = arith.constant 240 : i32
    %78 = tpu.dynamic_rotate %67 by %c240_i32_48 dim 1 : vector<192x256xf32>, i32 -> vector<192x256xf32>
    %cst_49 = arith.constant dense<0.000000e+00> : vector<64x256xf32>
    %79 = tpu.matmul %77, %78, %cst_49 {dimension_numbers = #tpu.dot_dimension_numbers<[1], [0], [0], [1], [0, 0, 1, 1], [], []>} : vector<64x192xf32>, vector<192x256xf32>, vector<64x256xf32> -> vector<64x256xf32>
    %80 = arith.addf %75, %79 : vector<64x256xf32>
    %c0_50 = arith.constant 0 : index
    %c0_51 = arith.constant 0 : index
    %81 = vector.load %arg5[%c0_50, %c0_51] : memref<64x1xf32, #tpu.memory_space<vmem>>, vector<64x1xf32>
    %82 = vector.broadcast %81 : vector<64x1xf32> to vector<64x256xf32>
    %83 = arith.addf %80, %82 : vector<64x256xf32>
    %84 = math.tanh %83 : vector<64x256xf32>
    %c0_52 = arith.constant 0 : index
    %c0_53 = arith.constant 0 : index
    %85 = vector.load %arg6[%c0_52, %c0_53] : memref<2x64xf32, #tpu.memory_space<vmem>>, vector<2x64xf32>
    %cst_54 = arith.constant dense<0.000000e+00> : vector<2x256xf32>
    %86 = tpu.matmul %85, %84, %cst_54 {dimension_numbers = #tpu.dot_dimension_numbers<[1], [0], [0], [1], [0, 0, 1, 1], [], []>} : vector<2x64xf32>, vector<64x256xf32>, vector<2x256xf32> -> vector<2x256xf32>
    %c0_55 = arith.constant 0 : index
    %c0_56 = arith.constant 0 : index
    %87 = vector.load %arg7[%c0_55, %c0_56] : memref<2x1xf32, #tpu.memory_space<vmem>>, vector<2x1xf32>
    %88 = vector.broadcast %87 : vector<2x1xf32> to vector<2x256xf32>
    %89 = arith.addf %86, %88 : vector<2x256xf32>
    %90 = math.tanh %89 : vector<2x256xf32>
    %91 = vector.extract_strided_slice %22 {offsets = [0, 0], sizes = [2, 256], strides = [1, 1]} : vector<8x256xf32> to vector<2x256xf32>
    %92 = arith.addf %90, %91 : vector<2x256xf32>
    %c0_57 = arith.constant 0 : index
    %c0_58 = arith.constant 0 : index
    %c0_59 = arith.constant 0 : index
    %93 = vector.load %arg8[%c0_57, %c0_58, %c0_59] : memref<1x2x256xf32, #tpu.memory_space<vmem>>, vector<1x2x256xf32>
    %94 = vector.shape_cast %93 : vector<1x2x256xf32> to vector<2x256xf32>
    %95 = vector.shape_cast %92 : vector<2x256xf32> to vector<1x2x256xf32>
    tpu.vector_store %arg8[%c0_57, %c0_58, %c0_59], %95 {strides = array<i32>} : memref<1x2x256xf32, #tpu.memory_space<vmem>>, vector<1x2x256xf32>,
    return
  }
  func.func @transform_0(%arg0: i32) -> (i32, i32, i32) {
    %c0_i32 = arith.constant 0 : i32
    %c0_i32_0 = arith.constant 0 : i32
    %c0_i32_1 = arith.constant 0 : i32
    return %arg0, %c0_i32, %c0_i32_0 : i32, i32, i32
  }
  func.func @transform_1(%arg0: i32) -> (i32, i32, i32) {
    %c0_i32 = arith.constant 0 : i32
    %c0_i32_0 = arith.constant 0 : i32
    %c0_i32_1 = arith.constant 0 : i32
    %c0_i32_2 = arith.constant 0 : i32
    return %c0_i32, %c0_i32_0, %c0_i32_1 : i32, i32, i32
  }
  func.func @transform_2(%arg0: i32) -> (i32, i32) {
    %c0_i32 = arith.constant 0 : i32
    %c0_i32_0 = arith.constant 0 : i32
    %c0_i32_1 = arith.constant 0 : i32
    return %c0_i32, %c0_i32_0 : i32, i32
  }
  func.func @transform_3(%arg0: i32) -> (i32, i32, i32) {
    %c0_i32 = arith.constant 0 : i32
    %c0_i32_0 = arith.constant 0 : i32
    %c0_i32_1 = arith.constant 0 : i32
    %c0_i32_2 = arith.constant 0 : i32
    return %c0_i32, %c0_i32_0, %c0_i32_1 : i32, i32, i32
  }
  func.func @transform_4(%arg0: i32) -> (i32, i32) {
    %c0_i32 = arith.constant 0 : i32
    %c0_i32_0 = arith.constant 0 : i32
    %c0_i32_1 = arith.constant 0 : i32
    return %c0_i32, %c0_i32_0 : i32, i32
  }
  func.func @transform_5(%arg0: i32) -> (i32, i32) {
    %c0_i32 = arith.constant 0 : i32
    %c0_i32_0 = arith.constant 0 : i32
    %c0_i32_1 = arith.constant 0 : i32
    return %c0_i32, %c0_i32_0 : i32, i32
  }
  func.func @transform_6(%arg0: i32) -> (i32, i32) {
    %c0_i32 = arith.constant 0 : i32
    %c0_i32_0 = arith.constant 0 : i32
    %c0_i32_1 = arith.constant 0 : i32
    return %c0_i32, %c0_i32_0 : i32, i32
  }
  func.func @transform_7(%arg0: i32) -> (i32, i32, i32) {
    %c0_i32 = arith.constant 0 : i32
    %c0_i32_0 = arith.constant 0 : i32
    %c0_i32_1 = arith.constant 0 : i32
    return %arg0, %c0_i32, %c0_i32_0 : i32, i32, i32
  }
}

</mosaic_0001>

<llo_original>
// kernel: tpu_custom_call.1
$region0: #{tpu_custom_call.1}
  #allocation0 [shape = 'u32[]', space=smem, size = 0x4, offset = 0x4, fixed_abs, tag = 'smem constant byte address 0x4 - core index']
  #allocation1 [shape = 'u32[144,128]{1,0:T(1,128)}', space=vmem, size = 0x12000, scoped, tag = 'internal scratch']
  #allocation2 [shape = 'f32[24,256]{1,0:T(8,128)}', space=vmem, size = 0x6000, scoped, tag = 'scratch operand']
  #allocation3 [shape = 'f32[192,256]{1,0:T(8,128)}', space=vmem, size = 0x30000, scoped, tag = 'scratch operand']
  %s0 = inlined_call_operand.hbm [shape: f32[2,8,256], index: 0, kind: input, shape index: {}]
  %s1 = inlined_call_operand.vmem [shape: f32[3,64,24], index: 1, kind: input, shape index: {}]
  %s2 = inlined_call_operand.vmem [shape: f32[64,1], index: 2, kind: input, shape index: {}]
  %s3 = inlined_call_operand.vmem [shape: f32[3,64,192], index: 3, kind: input, shape index: {}]
  %s4 = inlined_call_operand.vmem [shape: f32[64,1], index: 4, kind: input, shape index: {}]
  %s5 = inlined_call_operand.vmem [shape: f32[2,64], index: 5, kind: input, shape index: {}]
  %s6 = inlined_call_operand.vmem [shape: f32[2,1], index: 6, kind: input, shape index: {}]
  %s7 = inlined_call_operand.hbm [shape: f32[2,2,256], index: 7, kind: output, shape index: {}]
  %s8 = sld [smem:[#allocation0]]
  $region65: #{tpu_custom_call.1} parent=0
    _
  %s10 = ssub.s32 1, %s8
  %s11 = scalar_select 0, %s10, %s8
  $region1: #{tpu_custom_call.1} parent=0
    #allocation4 [shape = 'u8[16384]{0}', space=vmem, size = 0x4000, scoped, tag = 'input window, operand 0']
    #allocation5 [shape = 's32[2]{0}', space=sflag, size = 0x8, scoped, tag = 'scoped memory for tpu_custom_call.1']
    #allocation6 [shape = 's32[2]{0}', space=sflag, size = 0x8, scoped, tag = 'scoped memory for tpu_custom_call.1']
    #allocation7 [shape = 'u8[4096]{0}', space=vmem, size = 0x1000, scoped, tag = 'output window, operand 0']
    %12 = vsyncpa [#allocation5], 0
    %s13 = scalar_lea.sflag [#allocation5], 1
    %14 = vsyncpa %s13, 0
    %15 = vsyncpa [#allocation6], 0
    %s16 = scalar_lea.sflag [#allocation6], 1
    %17 = vsyncpa %s16, 0
    loop: start=0, step=1, limit=4
    $region2: #{tpu_custom_call.1} parent=1 // loop_pre_header
      _
    $region3: #{tpu_custom_call.1} parent=1 // loop_header
      %s19 = sphi 0, %s23
      %p20 = scmp.ge.s32.totalorder %s19, 4
      %s29 = sphi 0, %s31
      %s32 = sphi 0, %s29
      %s33 = sphi 0, %s32
      %s49 = sphi 0, %s33
      %s53 = sphi 0, %s53
      %s55 = sphi 0, %s53
      %s56 = sphi 0, %s55
      %s70 = sphi 0, %s56
      %s74 = sphi 0, %s74
      %s76 = sphi 0, %s74
      %s77 = sphi 0, %s76
      %s91 = sphi 0, %s77
      %s95 = sphi 0, %s95
      %s97 = sphi 0, %s95
      %s98 = sphi 0, %s97
      %s112 = sphi 0, %s98
      %s116 = sphi 0, %s116
      %s118 = sphi 0, %s116
      %s119 = sphi 0, %s118
      %s133 = sphi 0, %s119
      %s137 = sphi 0, %s137
      %s139 = sphi 0, %s137
      %s140 = sphi 0, %s139
      %s154 = sphi 0, %s140
      %s158 = sphi 0, %s158
      %s160 = sphi 0, %s158
      %s161 = sphi 0, %s160
      %s175 = sphi 0, %s161
      %s181 = sphi 0, %s183
      %s184 = sphi 0, %s181
      %s185 = sphi 0, %s184
      %s201 = sphi 0, %s185
    $region4: #{tpu_custom_call.1} parent=1 // loop_header_branch
      %22 = sbr.rel (%p20) target = $region8
    $region5: #{tpu_custom_call.1} parent=1 // loop_body
      %s24 = ssub.s32 %s19, 1
      %s25 = ssub.s32 %s19, 2
      %s26 = sadd.s32 %s19, 1
      %s27 = ssub.s32 %s19, %s26
      %p28 = scmp.eq.s32.totalorder %s27, 0
      %s30 = sadd.s32 %s29, 1
      %s31 = scalar_select %p28, %s29, %s30
      %p34 = pneg %p28
      %p35 = scmp.eq.s32.totalorder %s19, 1
      %p36 = por %p34, %p35
      %p37 = scmp.ne.s32.totalorder %s29, %s32
      %p38 = scmp.eq.s32.totalorder %s19, 0
      %p39 = por %p37, %p38
      %p40 = scmp.ne.s32.totalorder %s29, %s32
      %p41 = scmp.eq.s32.totalorder %s24, 1
      %p42 = por %p40, %p41
      %p43 = scmp.ne.s32.totalorder %s32, %s33
      %p44 = scmp.eq.s32.totalorder %s24, 0
      %p45 = por %p43, %p44
      %p46 = scmp.ne.s32.totalorder %s32, %s33
      %p47 = scmp.eq.s32.totalorder %s25, 1
      %p48 = por %p46, %p47
      %p50 = scmp.ne.s32.totalorder %s33, %s49
      %p51 = scmp.eq.s32.totalorder %s25, 0
      %p52 = por %p50, %p51
      %s54 = sadd.s32 %s53, 1
      %p57 = scmp.eq.s32.totalorder %s19, 1
      %p58 = scmp.ne.s32.totalorder %s53, %s55
      %p59 = scmp.eq.s32.totalorder %s19, 0
      %p60 = por %p58, %p59
      %p61 = scmp.ne.s32.totalorder %s53, %s55
      %p62 = scmp.eq.s32.totalorder %s24, 1
      %p63 = por %p61, %p62
      %p64 = scmp.ne.s32.totalorder %s55, %s56
      %p65 = scmp.eq.s32.totalorder %s24, 0
      %p66 = por %p64, %p65
      %p67 = scmp.ne.s32.totalorder %s55, %s56
      %p68 = scmp.eq.s32.totalorder %s25, 1
      %p69 = por %p67, %p68
      %p71 = scmp.ne.s32.totalorder %s56, %s70
      %p72 = scmp.eq.s32.totalorder %s25, 0
      %p73 = por %p71, %p72
      %s75 = sadd.s32 %s74, 1
      %p78 = scmp.eq.s32.totalorder %s19, 1
      %p79 = scmp.ne.s32.totalorder %s74, %s76
      %p80 = scmp.eq.s32.totalorder %s19, 0
      %p81 = por %p79, %p80
      %p82 = scmp.ne.s32.totalorder %s74, %s76
      %p83 = scmp.eq.s32.totalorder %s24, 1
      %p84 = por %p82, %p83
      %p85 = scmp.ne.s32.totalorder %s76, %s77
      %p86 = scmp.eq.s32.totalorder %s24, 0
      %p87 = por %p85, %p86
      %p88 = scmp.ne.s32.totalorder %s76, %s77
      %p89 = scmp.eq.s32.totalorder %s25, 1
      %p90 = por %p88, %p89
      %p92 = scmp.ne.s32.totalorder %s77, %s91
      %p93 = scmp.eq.s32.totalorder %s25, 0
      %p94 = por %p92, %p93
      %s96 = sadd.s32 %s95, 1
      %p99 = scmp.eq.s32.totalorder %s19, 1
      %p100 = scmp.ne.s32.totalorder %s95, %s97
      %p101 = scmp.eq.s32.totalorder %s19, 0
      %p102 = por %p100, %p101
      %p103 = scmp.ne.s32.totalorder %s95, %s97
      %p104 = scmp.eq.s32.totalorder %s24, 1
      %p105 = por %p103, %p104
      %p106 = scmp.ne.s32.totalorder %s97, %s98
      %p107 = scmp.eq.s32.totalorder %s24, 0
      %p108 = por %p106, %p107
      %p109 = scmp.ne.s32.totalorder %s97, %s98
      %p110 = scmp.eq.s32.totalorder %s25, 1
      %p111 = por %p109, %p110
      %p113 = scmp.ne.s32.totalorder %s98, %s112
      %p114 = scmp.eq.s32.totalorder %s25, 0
      %p115 = por %p113, %p114
      %s117 = sadd.s32 %s116, 1
      %p120 = scmp.eq.s32.totalorder %s19, 1
      %p121 = scmp.ne.s32.totalorder %s116, %s118
      %p122 = scmp.eq.s32.totalorder %s19, 0
      %p123 = por %p121, %p122
      %p124 = scmp.ne.s32.totalorder %s116, %s118
      %p125 = scmp.eq.s32.totalorder %s24, 1
      %p126 = por %p124, %p125
      %p127 = scmp.ne.s32.totalorder %s118, %s119
      %p128 = scmp.eq.s32.totalorder %s24, 0
      %p129 = por %p127, %p128
      %p130 = scmp.ne.s32.totalorder %s118, %s119
      %p131 = scmp.eq.s32.totalorder %s25, 1
      %p132 = por %p130, %p131
      %p134 = scmp.ne.s32.totalorder %s119, %s133
      %p135 = scmp.eq.s32.totalorder %s25, 0
      %p136 = por %p134, %p135
      %s138 = sadd.s32 %s137, 1
      %p141 = scmp.eq.s32.totalorder %s19, 1
      %p142 = scmp.ne.s32.totalorder %s137, %s139
      %p143 = scmp.eq.s32.totalorder %s19, 0
      %p144 = por %p142, %p143
      %p145 = scmp.ne.s32.totalorder %s137, %s139
      %p146 = scmp.eq.s32.totalorder %s24, 1
      %p147 = por %p145, %p146
      %p148 = scmp.ne.s32.totalorder %s139, %s140
      %p149 = scmp.eq.s32.totalorder %s24, 0
      %p150 = por %p148, %p149
      %p151 = scmp.ne.s32.totalorder %s139, %s140
      %p152 = scmp.eq.s32.totalorder %s25, 1
      %p153 = por %p151, %p152
      %p155 = scmp.ne.s32.totalorder %s140, %s154
      %p156 = scmp.eq.s32.totalorder %s25, 0
      %p157 = por %p155, %p156
      %s159 = sadd.s32 %s158, 1
      %p162 = scmp.eq.s32.totalorder %s19, 1
      %p163 = scmp.ne.s32.totalorder %s158, %s160
      %p164 = scmp.eq.s32.totalorder %s19, 0
      %p165 = por %p163, %p164
      %p166 = scmp.ne.s32.totalorder %s158, %s160
      %p167 = scmp.eq.s32.totalorder %s24, 1
      %p168 = por %p166, %p167
      %p169 = scmp.ne.s32.totalorder %s160, %s161
      %p170 = scmp.eq.s32.totalorder %s24, 0
      %p171 = por %p169, %p170
      %p172 = scmp.ne.s32.totalorder %s160, %s161
      %p173 = scmp.eq.s32.totalorder %s25, 1
      %p174 = por %p172, %p173
      %p176 = scmp.ne.s32.totalorder %s161, %s175
      %p177 = scmp.eq.s32.totalorder %s25, 0
      %p178 = por %p176, %p177
      %s179 = ssub.s32 %s19, %s26
      %p180 = scmp.eq.s32.totalorder %s179, 0
      %s182 = sadd.s32 %s181, 1
      %s183 = scalar_select %p180, %s181, %s182
      %p186 = pneg %p180
      %p187 = scmp.eq.s32.totalorder %s19, 1
      %p188 = por %p186, %p187
      %p189 = scmp.ne.s32.totalorder %s181, %s184
      %p190 = scmp.eq.s32.totalorder %s19, 0
      %p191 = por %p189, %p190
      %p192 = scmp.ne.s32.totalorder %s181, %s184
      %p193 = scmp.eq.s32.totalorder %s24, 1
      %p194 = por %p192, %p193
      %p195 = scmp.ne.s32.totalorder %s184, %s185
      %p196 = scmp.eq.s32.totalorder %s24, 0
      %p197 = por %p195, %p196
      %p198 = scmp.ne.s32.totalorder %s184, %s185
      %p199 = scmp.eq.s32.totalorder %s25, 1
      %p200 = por %p198, %p199
      %p202 = scmp.ne.s32.totalorder %s185, %s201
      %p203 = scmp.eq.s32.totalorder %s25, 0
      %p204 = por %p202, %p203
      %p205 = scmp.le.s32.totalorder 1, %s19
      %p206 = scmp.lt.s32.totalorder %s19, 3
      %p207 = pnand %p205, %p206
      %p208 = pneg %p207
      // Predicated region
      $region9: #{tpu_custom_call.1} parent=5 // pred_check
        _
      $region10: #{tpu_custom_call.1} parent=5 // pred_check_branch
        %210 = sbr.rel (%p207) target = $region12
      $region11: #{tpu_custom_call.1} parent=5 // pred_region
        %s211 = ssub.s32 %s19, 1
        // Predicated region
        $region13: #{tpu_custom_call.1} parent=11 // pred_check
          %p212 = pneg %p66
        $region14: #{tpu_custom_call.1} parent=11 // pred_check_branch
          %214 = sbr.rel (%p212) target = $region16
        $region15: #{tpu_custom_call.1} parent=11 // pred_region
          _
        $region16: #{tpu_custom_call.1} parent=11 // pred_fallthru
          _
        // Predicated region
        $region17: #{tpu_custom_call.1} parent=11 // pred_check
          %p215 = pneg %p87
        $region18: #{tpu_custom_call.1} parent=11 // pred_check_branch
          %217 = sbr.rel (%p215) target = $region20
        $region19: #{tpu_custom_call.1} parent=11 // pred_region
          _
        $region20: #{tpu_custom_call.1} parent=11 // pred_fallthru
          _
        // Predicated region
        $region21: #{tpu_custom_call.1} parent=11 // pred_check
          %p218 = pneg %p108
        $region22: #{tpu_custom_call.1} parent=11 // pred_check_branch
          %220 = sbr.rel (%p218) target = $region24
        $region23: #{tpu_custom_call.1} parent=11 // pred_region
          _
        $region24: #{tpu_custom_call.1} parent=11 // pred_fallthru
          _
        // Predicated region
        $region25: #{tpu_custom_call.1} parent=11 // pred_check
          %p221 = pneg %p129
        $region26: #{tpu_custom_call.1} parent=11 // pred_check_branch
          %223 = sbr.rel (%p221) target = $region28
        $region27: #{tpu_custom_call.1} parent=11 // pred_region
          _
        $region28: #{tpu_custom_call.1} parent=11 // pred_fallthru
          _
        // Predicated region
        $region29: #{tpu_custom_call.1} parent=11 // pred_check
          %p224 = pneg %p150
        $region30: #{tpu_custom_call.1} parent=11 // pred_check_branch
          %226 = sbr.rel (%p224) target = $region32
        $region31: #{tpu_custom_call.1} parent=11 // pred_region
          _
        $region32: #{tpu_custom_call.1} parent=11 // pred_fallthru
          _
        // Predicated region
        $region33: #{tpu_custom_call.1} parent=11 // pred_check
          %p227 = pneg %p171
        $region34: #{tpu_custom_call.1} parent=11 // pred_check_branch
          %229 = sbr.rel (%p227) target = $region36
        $region35: #{tpu_custom_call.1} parent=11 // pred_region
          _
        $region36: #{tpu_custom_call.1} parent=11 // pred_fallthru
          _
      $region12: #{tpu_custom_call.1} parent=5 // pred_fallthru
        _
      %p230 = scmp.lt.s32.totalorder %s19, 2
      // Predicated region
      $region37: #{tpu_custom_call.1} parent=5 // pred_check
        %p231 = pneg %p230
      $region38: #{tpu_custom_call.1} parent=5 // pred_check_branch
        %233 = sbr.rel (%p231) target = $region40
      $region39: #{tpu_custom_call.1} parent=5 // pred_region
        // Predicated region
        $region41: #{tpu_custom_call.1} parent=39 // pred_check
          %p234 = pneg %p39
        $region42: #{tpu_custom_call.1} parent=39 // pred_check_branch
          %236 = sbr.rel (%p234) target = $region44
        $region43: #{tpu_custom_call.1} parent=39 // pred_region
          %s237 = sand.u32 %s29, 1
          %s238 = scalar_lea.sflag [#allocation5], %s237
          %s239 = sand.u32 %s29, 1
          %s240 = smul.addr %s239, 16
          %s241 = scalar_lea.vmem [#allocation4], %s240
          %s243 = ssub.s32 256, 256
          %244 = vsyncadd %s238, %s243
          %s245 = smul.addr %s19, 2
          %s246 = smul.addr %s245, 128
          %s247 = scalar_lea.hbm %s0, %s246
          %s249 = sshll.u32 %s241, 4
          %s250 = int_to_ptr.vmem [resolvable:$true] %s249
          %252 = dma.hbm_to_vmem [thread:$0]  %s247, 256, %s250, %s238
        $region44: #{tpu_custom_call.1} parent=39 // pred_fallthru
          _
      $region40: #{tpu_custom_call.1} parent=5 // pred_fallthru
        _
      %p253 = scmp.le.s32.totalorder 1, %s19
      %p254 = scmp.lt.s32.totalorder %s19, 3
      %p255 = pnand %p253, %p254
      %p256 = pneg %p255
      // Predicated region
      $region45: #{tpu_custom_call.1} parent=5 // pred_check
        _
      $region46: #{tpu_custom_call.1} parent=5 // pred_check_branch
        %258 = sbr.rel (%p255) target = $region48
      $region47: #{tpu_custom_call.1} parent=5 // pred_region
        %s259 = ssub.s32 %s19, 1
        %s260 = sand.u32 %s32, 1
        %s261 = scalar_lea.sflag [#allocation5], %s260
        %s262 = sand.u32 %s32, 1
        %s263 = smul.addr %s262, 16
        %s264 = scalar_lea.vmem [#allocation4], %s263
        // Predicated region
        $region49: #{tpu_custom_call.1} parent=47 // pred_check
          %p265 = pneg %p45
        $region50: #{tpu_custom_call.1} parent=47 // pred_check_branch
          %267 = sbr.rel (%p265) target = $region52
        $region51: #{tpu_custom_call.1} parent=47 // pred_region
          %268 = dma.done %s261, 256
        $region52: #{tpu_custom_call.1} parent=47 // pred_fallthru
          _
        %s269 = sand.u32 %s32, 1
        %s270 = scalar_lea.sflag [#allocation5], %s269
        %s271 = sand.u32 %s32, 1
        %s272 = smul.addr %s271, 16
        %s273 = scalar_lea.vmem [#allocation4], %s272
        %p274 = pneg %p45
        %p275 = pneg %p42
        %p276 = pneg %p66
        %p277 = pneg %p63
        %p278 = pneg %p87
        %p279 = pneg %p84
        %p280 = pneg %p108
        %p281 = pneg %p105
        %p282 = pneg %p129
        %p283 = pneg %p126
        %p284 = pneg %p150
        %p285 = pneg %p147
        %p286 = pneg %p171
        %p287 = pneg %p168
        %p288 = pneg %p197
        %p289 = pneg %p194
        %s290 = sand.u32 %s184, 1
        %s291 = scalar_lea.sflag [#allocation6], %s290
        %s292 = sand.u32 %s184, 1
        %s293 = smul.addr %s292, 4
        %s294 = scalar_lea.vmem [#allocation7], %s293
        %v295 = vlaneseq
        %v296 = vand.u32 %v295, 127
        %v297 = vadd.s32 %v296, 128
        %vm298 = vcmp.lt.s32.totalorder %v296, 0
        %v299 = vsub.s32 0, %v296
        %v300 = vsel %vm298, %v299, %v296
        %v301 = vshrl.u32 %v300, 4
        %v302 = vand.u32 %v300, 15
        %v303 = vsub.s32 0, %v302
        %v304 = vsel %vm298, %v303, %v302
        %vm305 = vcmp.lt.s32.totalorder %v297, 0
        %v306 = vsub.s32 0, %v297
        %v307 = vsel %vm305, %v306, %v297
        %v308 = vshrl.u32 %v307, 4
        %v309 = vand.u32 %v307, 15
        %v310 = vsub.s32 0, %v309
        %v311 = vsel %vm305, %v310, %v309
        %vm312 = vcmp.ne.s32.totalorder %v304, 0
        %vm313 = vcmp.ne.s32.totalorder %v311, 0
        %vm314 = vcmp.lt.s32.totalorder %v304, 0
        %vm315 = vcmp.lt.s32.totalorder %v311, 0
        %vm316 = vmand %vm314, %vm312
        %vm317 = vmand %vm315, %vm313
        %v318 = vadd.s32 %v304, 16
        %v319 = vadd.s32 %v311, 16
        %v320 = vsel %vm316, %v318, %v304
        %v321 = vsel %vm317, %v319, %v311
        %vm322 = vcmp.eq.s32.totalorder %v320, 0
        %vm323 = vcmp.eq.s32.totalorder %v321, 0
        %vm324 = vcmp.eq.s32.totalorder %v320, 15
        %vm325 = vcmp.eq.s32.totalorder %v321, 15
        %v326 = vld [vmem:[%s264] sm:$0xff]
        %v327 = vld [vmem:[%s264 + $0x8] sm:$0xff]
        %328 = vrot.lane.b32.xlu0 %v326, 1
        %v329 = vpop.permute.xlu0 %328
        %330 = vrot.lane.b32.xlu0 %v327, 1
        %v331 = vpop.permute.xlu0 %330
        %vm332 = vcmp.lt.s32.totalorder %v296, 1
        %v333 = vsel %vm332, %v329, %v331
        %v334 = vsel %vm332, %v331, %v329
        %335 = vrot.lane.b32.xlu0 %v326, 113
        %v336 = vpop.permute.xlu0 %335
        %337 = vrot.lane.b32.xlu0 %v327, 113
        %v338 = vpop.permute.xlu0 %337
        %vm339 = vcmp.lt.s32.totalorder %v296, 113
        %v340 = vsel %vm339, %v336, %v338
        %v341 = vsel %vm339, %v338, %v336
        %v342 = vsel %vm322, 1, 0
        %v343 = vsel %vm323, 1, 0
        %vm344 = vcmp.eq.s32.totalorder %v342, 1
        %vm345 = vcmp.eq.s32.totalorder %v343, 1
        %v346 = vsel %vm344, %v340, %v334
        %v347 = vsel %vm345, %v341, %v333
        %348 = vst [vmem:[#allocation2] sm:$0xff] %v346
        %349 = vst [vmem:[#allocation2 + $0x8] sm:$0xff] %v347
        %350 = vst [vmem:[#allocation2 + $0x10] sm:$0xff] %v326
        %351 = vst [vmem:[#allocation2 + $0x18] sm:$0xff] %v327
        %352 = vrot.lane.b32.xlu0 %v326, 127
        %v353 = vpop.permute.xlu0 %352
        %354 = vrot.lane.b32.xlu0 %v327, 127
        %v355 = vpop.permute.xlu0 %354
        %vm356 = vcmp.lt.s32.totalorder %v296, 127
        %v357 = vsel %vm356, %v353, %v355
        %v358 = vsel %vm356, %v355, %v353
        %359 = vrot.lane.b32.xlu0 %v326, 15
        %v360 = vpop.permute.xlu0 %359
        %361 = vrot.lane.b32.xlu0 %v327, 15
        %v362 = vpop.permute.xlu0 %361
        %vm363 = vcmp.lt.s32.totalorder %v296, 15
        %v364 = vsel %vm363, %v360, %v362
        %v365 = vsel %vm363, %v362, %v360
        %v366 = vsel %vm324, 1, 0
        %v367 = vsel %vm325, 1, 0
        %vm368 = vcmp.eq.s32.totalorder %v366, 1
        %vm369 = vcmp.eq.s32.totalorder %v367, 1
        %v370 = vsel %vm368, %v365, %v357
        %v371 = vsel %vm369, %v364, %v358
        %372 = vst [vmem:[#allocation2 + $0x20] sm:$0xff] %v370
        %373 = vst [vmem:[#allocation2 + $0x28] sm:$0xff] %v371
        %v374 = vld [vmem:[#allocation2] sm:$0xff]
        %v375 = vld [vmem:[#allocation2 + $0x8] sm:$0xff]
        %v376 = vld [vmem:[#allocation2 + $0x10] sm:$0xff]
        %v377 = vld [vmem:[#allocation2 + $0x18] sm:$0xff]
        %v378 = vld [vmem:[#allocation2 + $0x20] sm:$0xff]
        %v379 = vld [vmem:[#allocation2 + $0x28] sm:$0xff]
        %s380 = scalar_lea.vmem %s1, 64
        %v381 = vld [vmem:[%s380] sm:$0xff]
        %v382 = vld [vmem:[%s380 + $0x8] sm:$0xff]
        %v383 = vld [vmem:[%s380 + $0x10] sm:$0xff]
        %v384 = vld [vmem:[%s380 + $0x18] sm:$0xff]
        %v385 = vld [vmem:[%s380 + $0x20] sm:$0xff]
        %v386 = vld [vmem:[%s380 + $0x28] sm:$0xff]
        %v387 = vld [vmem:[%s380 + $0x30] sm:$0xff]
        %v388 = vld [vmem:[%s380 + $0x38] sm:$0xff]
        %v389 = vld [vmem:[%s1] sm:$0xff]
        %v390 = vld [vmem:[%s1 + $0x8] sm:$0xff]
        %v391 = vld [vmem:[%s1 + $0x10] sm:$0xff]
        %v392 = vld [vmem:[%s1 + $0x18] sm:$0xff]
        %v393 = vld [vmem:[%s1 + $0x20] sm:$0xff]
        %v394 = vld [vmem:[%s1 + $0x28] sm:$0xff]
        %v395 = vld [vmem:[%s1 + $0x30] sm:$0xff]
        %v396 = vld [vmem:[%s1 + $0x38] sm:$0xff]
        %397 = vrot.lane.b32.xlu0 %v374, 16
        %v398 = vpop.permute.xlu0 %397
        %399 = vrot.lane.b32.xlu0 %v376, 16
        %v400 = vpop.permute.xlu0 %399
        %401 = vrot.lane.b32.xlu0 %v378, 16
        %v402 = vpop.permute.xlu0 %401
        %403 = vrot.lane.b32.xlu0 %v375, 16
        %v404 = vpop.permute.xlu0 %403
        %405 = vrot.lane.b32.xlu0 %v377, 16
        %v406 = vpop.permute.xlu0 %405
        %407 = vrot.lane.b32.xlu0 %v379, 16
        %v408 = vpop.permute.xlu0 %407
        %vm409 = vcmp.lt.s32.totalorder %v296, 16
        %v410 = vsel %vm409, %v398, %v404
        %v411 = vsel %vm409, %v400, %v406
        %v412 = vsel %vm409, %v402, %v408
        %v413 = vsel %vm409, %v404, %v398
        %v414 = vsel %vm409, %v406, %v400
        %v415 = vsel %vm409, %v408, %v402
        %vm416 = vcmask 195584
        %v418 = vsel %vm416, %v389, 0
        %v421 = vsel %vm416, %v390, 0
        %v424 = vsel %vm416, %v391, 0
        %v427 = vsel %vm416, %v392, 0
        %v430 = vsel %vm416, %v393, 0
        %v433 = vsel %vm416, %v394, 0
        %v436 = vsel %vm416, %v395, 0
        %v439 = vsel %vm416, %v396, 0
        %441 = vmatprep.subr.mxu0 0.0
        %442 = vmatpush1.msra.mxu0 0.0
        %443 = vmatprep.subr.mxu0 0.0
        %444 = vmatpush1.msra.mxu0 0.0
        %445 = vmatprep.subr.mxu0 0.0
        %446 = vmatpush1.msra.mxu0 0.0
        %447 = vmatprep.subr.mxu0 0.0
        %448 = vmatpush1.msra.mxu0 0.0
        %449 = vmatprep.subr.mxu0 0.0
        %450 = vmatpush1.msra.mxu0 0.0
        %451 = vmatprep.subr.mxu0 0.0
        %452 = vmatpush1.msra.mxu0 0.0
        %453 = vmatprep.subr.mxu0 0.0
        %454 = vmatpush1.msra.mxu0 0.0
        %455 = vmatprep.subr.mxu0 0.0
        %456 = vmatpush1.msra.mxu0 0.0
        %457 = vmatprep.subr.mxu0 0.0
        %458 = vmatpush1.msra.mxu0 0.0
        %459 = vmatprep.subr.mxu0 0.0
        %460 = vmatpush1.msra.mxu0 0.0
        %461 = vmatprep.subr.mxu0 0.0
        %462 = vmatpush1.msra.mxu0 0.0
        %463 = vmatprep.subr.mxu0 0.0
        %464 = vmatpush1.msra.mxu0 0.0
        %465 = vmatprep.subr.mxu0 0.0
        %466 = vmatpush1.msra.mxu0 0.0
        %467 = vmatprep.subr.mxu0 %v412
        %468 = vmatpush1.msra.mxu0 %v415
        %469 = vmatprep.subr.mxu0 %v411
        %470 = vmatpush1.msra.mxu0 %v414
        %471 = vmatprep.subr.mxu0 %v410
        %472 = vmatpush1.msra.mxu0 %v413
        %473 = vmatprep.subr.mxu0 0.0
        %474 = vmatpush2.msra.mxu0 0.0
        %475 = vmatprep.subr.mxu0 0.0
        %476 = vmatpush2.msra.mxu0 0.0
        %477 = vmatprep.subr.mxu0 0.0
        %478 = vmatpush2.msra.mxu0 0.0
        %479 = vmatprep.subr.mxu0 0.0
        %480 = vmatpush2.msra.mxu0 0.0
        %481 = vmatprep.subr.mxu0 0.0
        %482 = vmatpush2.msra.mxu0 0.0
        %483 = vmatprep.subr.mxu0 0.0
        %484 = vmatpush2.msra.mxu0 0.0
        %485 = vmatprep.subr.mxu0 0.0
        %486 = vmatpush2.msra.mxu0 0.0
        %487 = vmatprep.subr.mxu0 0.0
        %488 = vmatpush2.msra.mxu0 0.0
        %489 = vmatprep.subr.mxu0 0.0
        %490 = vmatpush2.msra.mxu0 0.0
        %491 = vmatprep.subr.mxu0 0.0
        %492 = vmatpush2.msra.mxu0 0.0
        %493 = vmatprep.subr.mxu0 0.0
        %494 = vmatpush2.msra.mxu0 0.0
        %495 = vmatprep.subr.mxu0 0.0
        %496 = vmatpush2.msra.mxu0 0.0
        %497 = vmatprep.subr.mxu0 0.0
        %498 = vmatpush2.msra.mxu0 0.0
        %499 = vmatprep.subr.mxu0 0.0
        %500 = vmatpush2.msra.mxu0 0.0
        %501 = vmatprep.subr.mxu0 0.0
        %502 = vmatpush2.msra.mxu0 0.0
        %503 = vmatprep.subr.mxu0 0.0
        %504 = vmatpush2.msra.mxu0 0.0
        %505 = vmatprep.mubr.f32.mxu0 0.0
        %506 = vmatmul.mubr.f32.gmra.mxu0 %v418
        %v507 = vpop.f32.mrf.mxu0
        %v508 = vadd.f32 0.0, %v507
        %v509 = vpop.f32.mrf.mxu0
        %v510 = vadd.f32 0.0, %v509
        %511 = vmatprep.mubr.f32.mxu0 0.0
        %512 = vmatmul.mubr.f32.gmra.mxu0 %v421
        %v513 = vpop.f32.mrf.mxu0
        %v514 = vadd.f32 0.0, %v513
        %v515 = vpop.f32.mrf.mxu0
        %v516 = vadd.f32 0.0, %v515
        %517 = vmatprep.mubr.f32.mxu0 0.0
        %518 = vmatmul.mubr.f32.gmra.mxu0 %v424
        %v519 = vpop.f32.mrf.mxu0
        %v520 = vadd.f32 0.0, %v519
        %v521 = vpop.f32.mrf.mxu0
        %v522 = vadd.f32 0.0, %v521
        %523 = vmatprep.mubr.f32.mxu0 0.0
        %524 = vmatmul.mubr.f32.gmra.mxu0 %v427
        %v525 = vpop.f32.mrf.mxu0
        %v526 = vadd.f32 0.0, %v525
        %v527 = vpop.f32.mrf.mxu0
        %v528 = vadd.f32 0.0, %v527
        %529 = vmatprep.mubr.f32.mxu0 0.0
        %530 = vmatmul.mubr.f32.gmra.mxu0 %v430
        %v531 = vpop.f32.mrf.mxu0
        %v532 = vadd.f32 0.0, %v531
        %v533 = vpop.f32.mrf.mxu0
        %v534 = vadd.f32 0.0, %v533
        %535 = vmatprep.mubr.f32.mxu0 0.0
        %536 = vmatmul.mubr.f32.gmra.mxu0 %v433
        %v537 = vpop.f32.mrf.mxu0
        %v538 = vadd.f32 0.0, %v537
        %v539 = vpop.f32.mrf.mxu0
        %v540 = vadd.f32 0.0, %v539
        %541 = vmatprep.mubr.f32.mxu0 0.0
        %542 = vmatmul.mubr.f32.gmra.mxu0 %v436
        %v543 = vpop.f32.mrf.mxu0
        %v544 = vadd.f32 0.0, %v543
        %v545 = vpop.f32.mrf.mxu0
        %v546 = vadd.f32 0.0, %v545
        %547 = vmatprep.mubr.f32.mxu0 0.0
        %548 = vmatmul.mubr.f32.gmra.mxu0 %v439
        %v549 = vpop.f32.mrf.mxu0
        %v550 = vadd.f32 0.0, %v549
        %v551 = vpop.f32.mrf.mxu0
        %v552 = vadd.f32 0.0, %v551
        %553 = vdwg.mxu0
        %v555 = vsel %vm416, %v381, 0
        %v558 = vsel %vm416, %v382, 0
        %v561 = vsel %vm416, %v383, 0
        %v564 = vsel %vm416, %v384, 0
        %v567 = vsel %vm416, %v385, 0
        %v570 = vsel %vm416, %v386, 0
        %v573 = vsel %vm416, %v387, 0
        %v576 = vsel %vm416, %v388, 0
        %578 = vmatprep.subr.mxu0 0.0
        %579 = vmatpush1.msra.mxu0 0.0
        %580 = vmatprep.subr.mxu0 0.0
        %581 = vmatpush1.msra.mxu0 0.0
        %582 = vmatprep.subr.mxu0 0.0
        %583 = vmatpush1.msra.mxu0 0.0
        %584 = vmatprep.subr.mxu0 0.0
        %585 = vmatpush1.msra.mxu0 0.0
        %586 = vmatprep.subr.mxu0 0.0
        %587 = vmatpush1.msra.mxu0 0.0
        %588 = vmatprep.subr.mxu0 0.0
        %589 = vmatpush1.msra.mxu0 0.0
        %590 = vmatprep.subr.mxu0 0.0
        %591 = vmatpush1.msra.mxu0 0.0
        %592 = vmatprep.subr.mxu0 0.0
        %593 = vmatpush1.msra.mxu0 0.0
        %594 = vmatprep.subr.mxu0 0.0
        %595 = vmatpush1.msra.mxu0 0.0
        %596 = vmatprep.subr.mxu0 0.0
        %597 = vmatpush1.msra.mxu0 0.0
        %598 = vmatprep.subr.mxu0 0.0
        %599 = vmatpush1.msra.mxu0 0.0
        %600 = vmatprep.subr.mxu0 0.0
        %601 = vmatpush1.msra.mxu0 0.0
        %602 = vmatprep.subr.mxu0 0.0
        %603 = vmatpush1.msra.mxu0 0.0
        %604 = vmatprep.subr.mxu0 %v379
        %605 = vmatpush1.msra.mxu0 %v378
        %606 = vmatprep.subr.mxu0 %v377
        %607 = vmatpush1.msra.mxu0 %v376
        %608 = vmatprep.subr.mxu0 %v375
        %609 = vmatpush1.msra.mxu0 %v374
        %610 = vmatprep.subr.mxu0 0.0
        %611 = vmatpush2.msra.mxu0 0.0
        %612 = vmatprep.subr.mxu0 0.0
        %613 = vmatpush2.msra.mxu0 0.0
        %614 = vmatprep.subr.mxu0 0.0
        %615 = vmatpush2.msra.mxu0 0.0
        %616 = vmatprep.subr.mxu0 0.0
        %617 = vmatpush2.msra.mxu0 0.0
        %618 = vmatprep.subr.mxu0 0.0
        %619 = vmatpush2.msra.mxu0 0.0
        %620 = vmatprep.subr.mxu0 0.0
        %621 = vmatpush2.msra.mxu0 0.0
        %622 = vmatprep.subr.mxu0 0.0
        %623 = vmatpush2.msra.mxu0 0.0
        %624 = vmatprep.subr.mxu0 0.0
        %625 = vmatpush2.msra.mxu0 0.0
        %626 = vmatprep.subr.mxu0 0.0
        %627 = vmatpush2.msra.mxu0 0.0
        %628 = vmatprep.subr.mxu0 0.0
        %629 = vmatpush2.msra.mxu0 0.0
        %630 = vmatprep.subr.mxu0 0.0
        %631 = vmatpush2.msra.mxu0 0.0
        %632 = vmatprep.subr.mxu0 0.0
        %633 = vmatpush2.msra.mxu0 0.0
        %634 = vmatprep.subr.mxu0 0.0
        %635 = vmatpush2.msra.mxu0 0.0
        %636 = vmatprep.subr.mxu0 0.0
        %637 = vmatpush2.msra.mxu0 0.0
        %638 = vmatprep.subr.mxu0 0.0
        %639 = vmatpush2.msra.mxu0 0.0
        %640 = vmatprep.subr.mxu0 0.0
        %641 = vmatpush2.msra.mxu0 0.0
        %642 = vmatprep.mubr.f32.mxu0 0.0
        %643 = vmatmul.mubr.f32.gmra.mxu0 %v555
        %v644 = vpop.f32.mrf.mxu0
        %v645 = vadd.f32 %v508, %v644
        %v646 = vpop.f32.mrf.mxu0
        %v647 = vadd.f32 %v510, %v646
        %648 = vmatprep.mubr.f32.mxu0 0.0
        %649 = vmatmul.mubr.f32.gmra.mxu0 %v558
        %v650 = vpop.f32.mrf.mxu0
        %v651 = vadd.f32 %v514, %v650
        %v652 = vpop.f32.mrf.mxu0
        %v653 = vadd.f32 %v516, %v652
        %654 = vmatprep.mubr.f32.mxu0 0.0
        %655 = vmatmul.mubr.f32.gmra.mxu0 %v561
        %v656 = vpop.f32.mrf.mxu0
        %v657 = vadd.f32 %v520, %v656
        %v658 = vpop.f32.mrf.mxu0
        %v659 = vadd.f32 %v522, %v658
        %660 = vmatprep.mubr.f32.mxu0 0.0
        %661 = vmatmul.mubr.f32.gmra.mxu0 %v564
        %v662 = vpop.f32.mrf.mxu0
        %v663 = vadd.f32 %v526, %v662
        %v664 = vpop.f32.mrf.mxu0
        %v665 = vadd.f32 %v528, %v664
        %666 = vmatprep.mubr.f32.mxu0 0.0
        %667 = vmatmul.mubr.f32.gmra.mxu0 %v567
        %v668 = vpop.f32.mrf.mxu0
        %v669 = vadd.f32 %v532, %v668
        %v670 = vpop.f32.mrf.mxu0
        %v671 = vadd.f32 %v534, %v670
        %672 = vmatprep.mubr.f32.mxu0 0.0
        %673 = vmatmul.mubr.f32.gmra.mxu0 %v570
        %v674 = vpop.f32.mrf.mxu0
        %v675 = vadd.f32 %v538, %v674
        %v676 = vpop.f32.mrf.mxu0
        %v677 = vadd.f32 %v540, %v676
        %678 = vmatprep.mubr.f32.mxu0 0.0
        %679 = vmatmul.mubr.f32.gmra.mxu0 %v573
        %v680 = vpop.f32.mrf.mxu0
        %v681 = vadd.f32 %v544, %v680
        %v682 = vpop.f32.mrf.mxu0
        %v683 = vadd.f32 %v546, %v682
        %684 = vmatprep.mubr.f32.mxu0 0.0
        %685 = vmatmul.mubr.f32.gmra.mxu0 %v576
        %v686 = vpop.f32.mrf.mxu0
        %v687 = vadd.f32 %v550, %v686
        %v688 = vpop.f32.mrf.mxu0
        %v689 = vadd.f32 %v552, %v688
        %690 = vdwg.mxu0
        %s691 = scalar_lea.vmem %s1, 128
        %v692 = vld [vmem:[%s691] sm:$0xff]
        %v693 = vld [vmem:[%s691 + $0x8] sm:$0xff]
        %v694 = vld [vmem:[%s691 + $0x10] sm:$0xff]
        %v695 = vld [vmem:[%s691 + $0x18] sm:$0xff]
        %v696 = vld [vmem:[%s691 + $0x20] sm:$0xff]
        %v697 = vld [vmem:[%s691 + $0x28] sm:$0xff]
        %v698 = vld [vmem:[%s691 + $0x30] sm:$0xff]
        %v699 = vld [vmem:[%s691 + $0x38] sm:$0xff]
        %700 = vrot.lane.b32.xlu0 %v374, 112
        %v701 = vpop.permute.xlu0 %700
        %702 = vrot.lane.b32.xlu0 %v376, 112
        %v703 = vpop.permute.xlu0 %702
        %704 = vrot.lane.b32.xlu0 %v378, 112
        %v705 = vpop.permute.xlu0 %704
        %706 = vrot.lane.b32.xlu0 %v375, 112
        %v707 = vpop.permute.xlu0 %706
        %708 = vrot.lane.b32.xlu0 %v377, 112
        %v709 = vpop.permute.xlu0 %708
        %710 = vrot.lane.b32.xlu0 %v379, 112
        %v711 = vpop.permute.xlu0 %710
        %vm712 = vcmp.lt.s32.totalorder %v296, 112
        %v713 = vsel %vm712, %v701, %v707
        %v714 = vsel %vm712, %v703, %v709
        %v715 = vsel %vm712, %v705, %v711
        %v716 = vsel %vm712, %v707, %v701
        %v717 = vsel %vm712, %v709, %v703
        %v718 = vsel %vm712, %v711, %v705
        %v720 = vsel %vm416, %v692, 0
        %v723 = vsel %vm416, %v693, 0
        %v726 = vsel %vm416, %v694, 0
        %v729 = vsel %vm416, %v695, 0
        %v732 = vsel %vm416, %v696, 0
        %v735 = vsel %vm416, %v697, 0
        %v738 = vsel %vm416, %v698, 0
        %v741 = vsel %vm416, %v699, 0
        %743 = vmatprep.subr.mxu0 0.0
        %744 = vmatpush1.msra.mxu0 0.0
        %745 = vmatprep.subr.mxu0 0.0
        %746 = vmatpush1.msra.mxu0 0.0
        %747 = vmatprep.subr.mxu0 0.0
        %748 = vmatpush1.msra.mxu0 0.0
        %749 = vmatprep.subr.mxu0 0.0
        %750 = vmatpush1.msra.mxu0 0.0
        %751 = vmatprep.subr.mxu0 0.0
        %752 = vmatpush1.msra.mxu0 0.0
        %753 = vmatprep.subr.mxu0 0.0
        %754 = vmatpush1.msra.mxu0 0.0
        %755 = vmatprep.subr.mxu0 0.0
        %756 = vmatpush1.msra.mxu0 0.0
        %757 = vmatprep.subr.mxu0 0.0
        %758 = vmatpush1.msra.mxu0 0.0
        %759 = vmatprep.subr.mxu0 0.0
        %760 = vmatpush1.msra.mxu0 0.0
        %761 = vmatprep.subr.mxu0 0.0
        %762 = vmatpush1.msra.mxu0 0.0
        %763 = vmatprep.subr.mxu0 0.0
        %764 = vmatpush1.msra.mxu0 0.0
        %765 = vmatprep.subr.mxu0 0.0
        %766 = vmatpush1.msra.mxu0 0.0
        %767 = vmatprep.subr.mxu0 0.0
        %768 = vmatpush1.msra.mxu0 0.0
        %769 = vmatprep.subr.mxu0 %v718
        %770 = vmatpush1.msra.mxu0 %v715
        %771 = vmatprep.subr.mxu0 %v717
        %772 = vmatpush1.msra.mxu0 %v714
        %773 = vmatprep.subr.mxu0 %v716
        %774 = vmatpush1.msra.mxu0 %v713
        %775 = vmatprep.subr.mxu0 0.0
        %776 = vmatpush2.msra.mxu0 0.0
        %777 = vmatprep.subr.mxu0 0.0
        %778 = vmatpush2.msra.mxu0 0.0
        %779 = vmatprep.subr.mxu0 0.0
        %780 = vmatpush2.msra.mxu0 0.0
        %781 = vmatprep.subr.mxu0 0.0
        %782 = vmatpush2.msra.mxu0 0.0
        %783 = vmatprep.subr.mxu0 0.0
        %784 = vmatpush2.msra.mxu0 0.0
        %785 = vmatprep.subr.mxu0 0.0
        %786 = vmatpush2.msra.mxu0 0.0
        %787 = vmatprep.subr.mxu0 0.0
        %788 = vmatpush2.msra.mxu0 0.0
        %789 = vmatprep.subr.mxu0 0.0
        %790 = vmatpush2.msra.mxu0 0.0
        %791 = vmatprep.subr.mxu0 0.0
        %792 = vmatpush2.msra.mxu0 0.0
        %793 = vmatprep.subr.mxu0 0.0
        %794 = vmatpush2.msra.mxu0 0.0
        %795 = vmatprep.subr.mxu0 0.0
        %796 = vmatpush2.msra.mxu0 0.0
        %797 = vmatprep.subr.mxu0 0.0
        %798 = vmatpush2.msra.mxu0 0.0
        %799 = vmatprep.subr.mxu0 0.0
        %800 = vmatpush2.msra.mxu0 0.0
        %801 = vmatprep.subr.mxu0 0.0
        %802 = vmatpush2.msra.mxu0 0.0
        %803 = vmatprep.subr.mxu0 0.0
        %804 = vmatpush2.msra.mxu0 0.0
        %805 = vmatprep.subr.mxu0 0.0
        %806 = vmatpush2.msra.mxu0 0.0
        %807 = vmatprep.mubr.f32.mxu0 0.0
        %808 = vmatmul.mubr.f32.gmra.mxu0 %v720
        %v809 = vpop.f32.mrf.mxu0
        %v810 = vadd.f32 0.0, %v809
        %v811 = vpop.f32.mrf.mxu0
        %v812 = vadd.f32 0.0, %v811
        %813 = vmatprep.mubr.f32.mxu0 0.0
        %814 = vmatmul.mubr.f32.gmra.mxu0 %v723
        %v815 = vpop.f32.mrf.mxu0
        %v816 = vadd.f32 0.0, %v815
        %v817 = vpop.f32.mrf.mxu0
        %v818 = vadd.f32 0.0, %v817
        %819 = vmatprep.mubr.f32.mxu0 0.0
        %820 = vmatmul.mubr.f32.gmra.mxu0 %v726
        %v821 = vpop.f32.mrf.mxu0
        %v822 = vadd.f32 0.0, %v821
        %v823 = vpop.f32.mrf.mxu0
        %v824 = vadd.f32 0.0, %v823
        %825 = vmatprep.mubr.f32.mxu0 0.0
        %826 = vmatmul.mubr.f32.gmra.mxu0 %v729
        %v827 = vpop.f32.mrf.mxu0
        %v828 = vadd.f32 0.0, %v827
        %v829 = vpop.f32.mrf.mxu0
        %v830 = vadd.f32 0.0, %v829
        %831 = vmatprep.mubr.f32.mxu0 0.0
        %832 = vmatmul.mubr.f32.gmra.mxu0 %v732
        %v833 = vpop.f32.mrf.mxu0
        %v834 = vadd.f32 0.0, %v833
        %v835 = vpop.f32.mrf.mxu0
        %v836 = vadd.f32 0.0, %v835
        %837 = vmatprep.mubr.f32.mxu0 0.0
        %838 = vmatmul.mubr.f32.gmra.mxu0 %v735
        %v839 = vpop.f32.mrf.mxu0
        %v840 = vadd.f32 0.0, %v839
        %v841 = vpop.f32.mrf.mxu0
        %v842 = vadd.f32 0.0, %v841
        %843 = vmatprep.mubr.f32.mxu0 0.0
        %844 = vmatmul.mubr.f32.gmra.mxu0 %v738
        %v845 = vpop.f32.mrf.mxu0
        %v846 = vadd.f32 0.0, %v845
        %v847 = vpop.f32.mrf.mxu0
        %v848 = vadd.f32 0.0, %v847
        %849 = vmatprep.mubr.f32.mxu0 0.0
        %850 = vmatmul.mubr.f32.gmra.mxu0 %v741
        %v851 = vpop.f32.mrf.mxu0
        %v852 = vadd.f32 0.0, %v851
        %v853 = vpop.f32.mrf.mxu0
        %v854 = vadd.f32 0.0, %v853
        %855 = vdwg.mxu0
        %v856 = vadd.f32 %v645, %v810
        %v857 = vadd.f32 %v647, %v812
        %v858 = vadd.f32 %v651, %v816
        %v859 = vadd.f32 %v653, %v818
        %v860 = vadd.f32 %v657, %v822
        %v861 = vadd.f32 %v659, %v824
        %v862 = vadd.f32 %v663, %v828
        %v863 = vadd.f32 %v665, %v830
        %v864 = vadd.f32 %v669, %v834
        %v865 = vadd.f32 %v671, %v836
        %v866 = vadd.f32 %v675, %v840
        %v867 = vadd.f32 %v677, %v842
        %v868 = vadd.f32 %v681, %v846
        %v869 = vadd.f32 %v683, %v848
        %v870 = vadd.f32 %v687, %v852
        %v871 = vadd.f32 %v689, %v854
        %v872 = vld [vmem:[%s2] sm:$0xff]
        %v873 = vld [vmem:[%s2 + $0x8] sm:$0xff]
        %v874 = vld [vmem:[%s2 + $0x10] sm:$0xff]
        %v875 = vld [vmem:[%s2 + $0x18] sm:$0xff]
        %v876 = vld [vmem:[%s2 + $0x20] sm:$0xff]
        %v877 = vld [vmem:[%s2 + $0x28] sm:$0xff]
        %v878 = vld [vmem:[%s2 + $0x30] sm:$0xff]
        %v879 = vld [vmem:[%s2 + $0x38] sm:$0xff]
        %881 = vset.pattern.permute.xlu0 0
        %882 = vperm.xlu0 %881, %v872
        %v883 = vpop.permute.xlu0 %882
        %886 = vset.pattern.permute.xlu0 0
        %887 = vperm.xlu0 %886, %v873
        %v888 = vpop.permute.xlu0 %887
        %891 = vset.pattern.permute.xlu0 0
        %892 = vperm.xlu0 %891, %v874
        %v893 = vpop.permute.xlu0 %892
        %896 = vset.pattern.permute.xlu0 0
        %897 = vperm.xlu0 %896, %v875
        %v898 = vpop.permute.xlu0 %897
        %901 = vset.pattern.permute.xlu0 0
        %902 = vperm.xlu0 %901, %v876
        %v903 = vpop.permute.xlu0 %902
        %906 = vset.pattern.permute.xlu0 0
        %907 = vperm.xlu0 %906, %v877
        %v908 = vpop.permute.xlu0 %907
        %911 = vset.pattern.permute.xlu0 0
        %912 = vperm.xlu0 %911, %v878
        %v913 = vpop.permute.xlu0 %912
        %916 = vset.pattern.permute.xlu0 0
        %917 = vperm.xlu0 %916, %v879
        %v918 = vpop.permute.xlu0 %917
        %v920 = vadd.f32 %v856, %v883
        %v921 = vadd.f32 %v857, %v883
        %v922 = vadd.f32 %v858, %v888
        %v923 = vadd.f32 %v859, %v888
        %v924 = vadd.f32 %v860, %v893
        %v925 = vadd.f32 %v861, %v893
        %v926 = vadd.f32 %v862, %v898
        %v927 = vadd.f32 %v863, %v898
        %v928 = vadd.f32 %v864, %v903
        %v929 = vadd.f32 %v865, %v903
        %v930 = vadd.f32 %v866, %v908
        %v931 = vadd.f32 %v867, %v908
        %v932 = vadd.f32 %v868, %v913
        %v933 = vadd.f32 %v869, %v913
        %v934 = vadd.f32 %v870, %v918
        %v935 = vadd.f32 %v871, %v918
        %v936 = vtanh.pop %v920
        %v937 = vtanh.pop %v921
        %v938 = vtanh.pop %v922
        %v939 = vtanh.pop %v923
        %v940 = vtanh.pop %v924
        %v941 = vtanh.pop %v925
        %v942 = vtanh.pop %v926
        %v943 = vtanh.pop %v927
        %v944 = vtanh.pop %v928
        %v945 = vtanh.pop %v929
        %v946 = vtanh.pop %v930
        %v947 = vtanh.pop %v931
        %v948 = vtanh.pop %v932
        %v949 = vtanh.pop %v933
        %v950 = vtanh.pop %v934
        %v951 = vtanh.pop %v935
        %952 = vrot.lane.b32.xlu0 %v936, 1
        %v953 = vpop.permute.xlu0 %952
        %954 = vrot.lane.b32.xlu0 %v938, 1
        %v955 = vpop.permute.xlu0 %954
        %956 = vrot.lane.b32.xlu0 %v940, 1
        %v957 = vpop.permute.xlu0 %956
        %958 = vrot.lane.b32.xlu0 %v942, 1
        %v959 = vpop.permute.xlu0 %958
        %960 = vrot.lane.b32.xlu0 %v944, 1
        %v961 = vpop.permute.xlu0 %960
        %962 = vrot.lane.b32.xlu0 %v946, 1
        %v963 = vpop.permute.xlu0 %962
        %964 = vrot.lane.b32.xlu0 %v948, 1
        %v965 = vpop.permute.xlu0 %964
        %966 = vrot.lane.b32.xlu0 %v950, 1
        %v967 = vpop.permute.xlu0 %966
        %968 = vrot.lane.b32.xlu0 %v937, 1
        %v969 = vpop.permute.xlu0 %968
        %970 = vrot.lane.b32.xlu0 %v939, 1
        %v971 = vpop.permute.xlu0 %970
        %972 = vrot.lane.b32.xlu0 %v941, 1
        %v973 = vpop.permute.xlu0 %972
        %974 = vrot.lane.b32.xlu0 %v943, 1
        %v975 = vpop.permute.xlu0 %974
        %976 = vrot.lane.b32.xlu0 %v945, 1
        %v977 = vpop.permute.xlu0 %976
        %978 = vrot.lane.b32.xlu0 %v947, 1
        %v979 = vpop.permute.xlu0 %978
        %980 = vrot.lane.b32.xlu0 %v949, 1
        %v981 = vpop.permute.xlu0 %980
        %982 = vrot.lane.b32.xlu0 %v951, 1
        %v983 = vpop.permute.xlu0 %982
        %v984 = vsel %vm332, %v953, %v969
        %v985 = vsel %vm332, %v955, %v971
        %v986 = vsel %vm332, %v957, %v973
        %v987 = vsel %vm332, %v959, %v975
        %v988 = vsel %vm332, %v961, %v977
        %v989 = vsel %vm332, %v963, %v979
        %v990 = vsel %vm332, %v965, %v981
        %v991 = vsel %vm332, %v967, %v983
        %v992 = vsel %vm332, %v969, %v953
        %v993 = vsel %vm332, %v971, %v955
        %v994 = vsel %vm332, %v973, %v957
        %v995 = vsel %vm332, %v975, %v959
        %v996 = vsel %vm332, %v977, %v961
        %v997 = vsel %vm332, %v979, %v963
        %v998 = vsel %vm332, %v981, %v965
        %v999 = vsel %vm332, %v983, %v967
        %1000 = vrot.lane.b32.xlu0 %v936, 113
        %v1001 = vpop.permute.xlu0 %1000
        %1002 = vrot.lane.b32.xlu0 %v938, 113
        %v1003 = vpop.permute.xlu0 %1002
        %1004 = vrot.lane.b32.xlu0 %v940, 113
        %v1005 = vpop.permute.xlu0 %1004
        %1006 = vrot.lane.b32.xlu0 %v942, 113
        %v1007 = vpop.permute.xlu0 %1006
        %1008 = vrot.lane.b32.xlu0 %v944, 113
        %v1009 = vpop.permute.xlu0 %1008
        %1010 = vrot.lane.b32.xlu0 %v946, 113
        %v1011 = vpop.permute.xlu0 %1010
        %1012 = vrot.lane.b32.xlu0 %v948, 113
        %v1013 = vpop.permute.xlu0 %1012
        %1014 = vrot.lane.b32.xlu0 %v950, 113
        %v1015 = vpop.permute.xlu0 %1014
        %1016 = vrot.lane.b32.xlu0 %v937, 113
        %v1017 = vpop.permute.xlu0 %1016
        %1018 = vrot.lane.b32.xlu0 %v939, 113
        %v1019 = vpop.permute.xlu0 %1018
        %1020 = vrot.lane.b32.xlu0 %v941, 113
        %v1021 = vpop.permute.xlu0 %1020
        %1022 = vrot.lane.b32.xlu0 %v943, 113
        %v1023 = vpop.permute.xlu0 %1022
        %1024 = vrot.lane.b32.xlu0 %v945, 113
        %v1025 = vpop.permute.xlu0 %1024
        %1026 = vrot.lane.b32.xlu0 %v947, 113
        %v1027 = vpop.permute.xlu0 %1026
        %1028 = vrot.lane.b32.xlu0 %v949, 113
        %v1029 = vpop.permute.xlu0 %1028
        %1030 = vrot.lane.b32.xlu0 %v951, 113
        %v1031 = vpop.permute.xlu0 %1030
        %v1032 = vsel %vm339, %v1001, %v1017
        %v1033 = vsel %vm339, %v1003, %v1019
        %v1034 = vsel %vm339, %v1005, %v1021
        %v1035 = vsel %vm339, %v1007, %v1023
        %v1036 = vsel %vm339, %v1009, %v1025
        %v1037 = vsel %vm339, %v1011, %v1027
        %v1038 = vsel %vm339, %v1013, %v1029
        %v1039 = vsel %vm339, %v1015, %v1031
        %v1040 = vsel %vm339, %v1017, %v1001
        %v1041 = vsel %vm339, %v1019, %v1003
        %v1042 = vsel %vm339, %v1021, %v1005
        %v1043 = vsel %vm339, %v1023, %v1007
        %v1044 = vsel %vm339, %v1025, %v1009
        %v1045 = vsel %vm339, %v1027, %v1011
        %v1046 = vsel %vm339, %v1029, %v1013
        %v1047 = vsel %vm339, %v1031, %v1015
        %v1048 = vsel %vm344, %v1032, %v992
        %v1049 = vsel %vm345, %v1040, %v984
        %v1050 = vsel %vm344, %v1033, %v993
        %v1051 = vsel %vm345, %v1041, %v985
        %v1052 = vsel %vm344, %v1034, %v994
        %v1053 = vsel %vm345, %v1042, %v986
        %v1054 = vsel %vm344, %v1035, %v995
        %v1055 = vsel %vm345, %v1043, %v987
        %v1056 = vsel %vm344, %v1036, %v996
        %v1057 = vsel %vm345, %v1044, %v988
        %v1058 = vsel %vm344, %v1037, %v997
        %v1059 = vsel %vm345, %v1045, %v989
        %v1060 = vsel %vm344, %v1038, %v998
        %v1061 = vsel %vm345, %v1046, %v990
        %v1062 = vsel %vm344, %v1039, %v999
        %v1063 = vsel %vm345, %v1047, %v991
        %1064 = vst [vmem:[#allocation3] sm:$0xff] %v1048
        %1065 = vst [vmem:[#allocation3 + $0x8] sm:$0xff] %v1049
        %1066 = vst [vmem:[#allocation3 + $0x10] sm:$0xff] %v1050
        %1067 = vst [vmem:[#allocation3 + $0x18] sm:$0xff] %v1051
        %1068 = vst [vmem:[#allocation3 + $0x20] sm:$0xff] %v1052
        %1069 = vst [vmem:[#allocation3 + $0x28] sm:$0xff] %v1053
        %1070 = vst [vmem:[#allocation3 + $0x30] sm:$0xff] %v1054
        %1071 = vst [vmem:[#allocation3 + $0x38] sm:$0xff] %v1055
        %1072 = vst [vmem:[#allocation3 + $0x40] sm:$0xff] %v1056
        %1073 = vst [vmem:[#allocation3 + $0x48] sm:$0xff] %v1057
        %1074 = vst [vmem:[#allocation3 + $0x50] sm:$0xff] %v1058
        %1075 = vst [vmem:[#allocation3 + $0x58] sm:$0xff] %v1059
        %1076 = vst [vmem:[#allocation3 + $0x60] sm:$0xff] %v1060
        %1077 = vst [vmem:[#allocation3 + $0x68] sm:$0xff] %v1061
        %1078 = vst [vmem:[#allocation3 + $0x70] sm:$0xff] %v1062
        %1079 = vst [vmem:[#allocation3 + $0x78] sm:$0xff] %v1063
        %1080 = vst [vmem:[#allocation3 + $0x80] sm:$0xff] %v936
        %1081 = vst [vmem:[#allocation3 + $0x88] sm:$0xff] %v937
        %1082 = vst [vmem:[#allocation3 + $0x90] sm:$0xff] %v938
        %1083 = vst [vmem:[#allocation3 + $0x98] sm:$0xff] %v939
        %1084 = vst [vmem:[#allocation3 + $0xa0] sm:$0xff] %v940
        %1085 = vst [vmem:[#allocation3 + $0xa8] sm:$0xff] %v941
        %1086 = vst [vmem:[#allocation3 + $0xb0] sm:$0xff] %v942
        %1087 = vst [vmem:[#allocation3 + $0xb8] sm:$0xff] %v943
        %1088 = vst [vmem:[#allocation3 + $0xc0] sm:$0xff] %v944
        %1089 = vst [vmem:[#allocation3 + $0xc8] sm:$0xff] %v945
        %1090 = vst [vmem:[#allocation3 + $0xd0] sm:$0xff] %v946
        %1091 = vst [vmem:[#allocation3 + $0xd8] sm:$0xff] %v947
        %1092 = vst [vmem:[#allocation3 + $0xe0] sm:$0xff] %v948
        %1093 = vst [vmem:[#allocation3 + $0xe8] sm:$0xff] %v949
        %1094 = vst [vmem:[#allocation3 + $0xf0] sm:$0xff] %v950
        %1095 = vst [vmem:[#allocation3 + $0xf8] sm:$0xff] %v951
        %1096 = vrot.lane.b32.xlu0 %v936, 127
        %v1097 = vpop.permute.xlu0 %1096
        %1098 = vrot.lane.b32.xlu0 %v938, 127
        %v1099 = vpop.permute.xlu0 %1098
        %1100 = vrot.lane.b32.xlu0 %v940, 127
        %v1101 = vpop.permute.xlu0 %1100
        %1102 = vrot.lane.b32.xlu0 %v942, 127
        %v1103 = vpop.permute.xlu0 %1102
        %1104 = vrot.lane.b32.xlu0 %v944, 127
        %v1105 = vpop.permute.xlu0 %1104
        %1106 = vrot.lane.b32.xlu0 %v946, 127
        %v1107 = vpop.permute.xlu0 %1106
        %1108 = vrot.lane.b32.xlu0 %v948, 127
        %v1109 = vpop.permute.xlu0 %1108
        %1110 = vrot.lane.b32.xlu0 %v950, 127
        %v1111 = vpop.permute.xlu0 %1110
        %1112 = vrot.lane.b32.xlu0 %v937, 127
        %v1113 = vpop.permute.xlu0 %1112
        %1114 = vrot.lane.b32.xlu0 %v939, 127
        %v1115 = vpop.permute.xlu0 %1114
        %1116 = vrot.lane.b32.xlu0 %v941, 127
        %v1117 = vpop.permute.xlu0 %1116
        %1118 = vrot.lane.b32.xlu0 %v943, 127
        %v1119 = vpop.permute.xlu0 %1118
        %1120 = vrot.lane.b32.xlu0 %v945, 127
        %v1121 = vpop.permute.xlu0 %1120
        %1122 = vrot.lane.b32.xlu0 %v947, 127
        %v1123 = vpop.permute.xlu0 %1122
        %1124 = vrot.lane.b32.xlu0 %v949, 127
        %v1125 = vpop.permute.xlu0 %1124
        %1126 = vrot.lane.b32.xlu0 %v951, 127
        %v1127 = vpop.permute.xlu0 %1126
        %v1128 = vsel %vm356, %v1097, %v1113
        %v1129 = vsel %vm356, %v1099, %v1115
        %v1130 = vsel %vm356, %v1101, %v1117
        %v1131 = vsel %vm356, %v1103, %v1119
        %v1132 = vsel %vm356, %v1105, %v1121
        %v1133 = vsel %vm356, %v1107, %v1123
        %v1134 = vsel %vm356, %v1109, %v1125
        %v1135 = vsel %vm356, %v1111, %v1127
        %v1136 = vsel %vm356, %v1113, %v1097
        %v1137 = vsel %vm356, %v1115, %v1099
        %v1138 = vsel %vm356, %v1117, %v1101
        %v1139 = vsel %vm356, %v1119, %v1103
        %v1140 = vsel %vm356, %v1121, %v1105
        %v1141 = vsel %vm356, %v1123, %v1107
        %v1142 = vsel %vm356, %v1125, %v1109
        %v1143 = vsel %vm356, %v1127, %v1111
        %1144 = vrot.lane.b32.xlu0 %v936, 15
        %v1145 = vpop.permute.xlu0 %1144
        %1146 = vrot.lane.b32.xlu0 %v938, 15
        %v1147 = vpop.permute.xlu0 %1146
        %1148 = vrot.lane.b32.xlu0 %v940, 15
        %v1149 = vpop.permute.xlu0 %1148
        %1150 = vrot.lane.b32.xlu0 %v942, 15
        %v1151 = vpop.permute.xlu0 %1150
        %1152 = vrot.lane.b32.xlu0 %v944, 15
        %v1153 = vpop.permute.xlu0 %1152
        %1154 = vrot.lane.b32.xlu0 %v946, 15
        %v1155 = vpop.permute.xlu0 %1154
        %1156 = vrot.lane.b32.xlu0 %v948, 15
        %v1157 = vpop.permute.xlu0 %1156
        %1158 = vrot.lane.b32.xlu0 %v950, 15
        %v1159 = vpop.permute.xlu0 %1158
        %1160 = vrot.lane.b32.xlu0 %v937, 15
        %v1161 = vpop.permute.xlu0 %1160
        %1162 = vrot.lane.b32.xlu0 %v939, 15
        %v1163 = vpop.permute.xlu0 %1162
        %1164 = vrot.lane.b32.xlu0 %v941, 15
        %v1165 = vpop.permute.xlu0 %1164
        %1166 = vrot.lane.b32.xlu0 %v943, 15
        %v1167 = vpop.permute.xlu0 %1166
        %1168 = vrot.lane.b32.xlu0 %v945, 15
        %v1169 = vpop.permute.xlu0 %1168
        %1170 = vrot.lane.b32.xlu0 %v947, 15
        %v1171 = vpop.permute.xlu0 %1170
        %1172 = vrot.lane.b32.xlu0 %v949, 15
        %v1173 = vpop.permute.xlu0 %1172
        %1174 = vrot.lane.b32.xlu0 %v951, 15
        %v1175 = vpop.permute.xlu0 %1174
        %v1176 = vsel %vm363, %v1145, %v1161
        %v1177 = vsel %vm363, %v1147, %v1163
        %v1178 = vsel %vm363, %v1149, %v1165
        %v1179 = vsel %vm363, %v1151, %v1167
        %v1180 = vsel %vm363, %v1153, %v1169
        %v1181 = vsel %vm363, %v1155, %v1171
        %v1182 = vsel %vm363, %v1157, %v1173
        %v1183 = vsel %vm363, %v1159, %v1175
        %v1184 = vsel %vm363, %v1161, %v1145
        %v1185 = vsel %vm363, %v1163, %v1147
        %v1186 = vsel %vm363, %v1165, %v1149
        %v1187 = vsel %vm363, %v1167, %v1151
        %v1188 = vsel %vm363, %v1169, %v1153
        %v1189 = vsel %vm363, %v1171, %v1155
        %v1190 = vsel %vm363, %v1173, %v1157
        %v1191 = vsel %vm363, %v1175, %v1159
        %v1192 = vsel %vm368, %v1184, %v1128
        %v1193 = vsel %vm369, %v1176, %v1136
        %v1194 = vsel %vm368, %v1185, %v1129
        %v1195 = vsel %vm369, %v1177, %v1137
        %v1196 = vsel %vm368, %v1186, %v1130
        %v1197 = vsel %vm369, %v1178, %v1138
        %v1198 = vsel %vm368, %v1187, %v1131
        %v1199 = vsel %vm369, %v1179, %v1139
        %v1200 = vsel %vm368, %v1188, %v1132
        %v1201 = vsel %vm369, %v1180, %v1140
        %v1202 = vsel %vm368, %v1189, %v1133
        %v1203 = vsel %vm369, %v1181, %v1141
        %v1204 = vsel %vm368, %v1190, %v1134
        %v1205 = vsel %vm369, %v1182, %v1142
        %v1206 = vsel %vm368, %v1191, %v1135
        %v1207 = vsel %vm369, %v1183, %v1143
        %1208 = vst [vmem:[#allocation3 + $0x100] sm:$0xff] %v1192
        %1209 = vst [vmem:[#allocation3 + $0x108] sm:$0xff] %v1193
        %1210 = vst [vmem:[#allocation3 + $0x110] sm:$0xff] %v1194
        %1211 = vst [vmem:[#allocation3 + $0x118] sm:$0xff] %v1195
        %1212 = vst [vmem:[#allocation3 + $0x120] sm:$0xff] %v1196
        %1213 = vst [vmem:[#allocation3 + $0x128] sm:$0xff] %v1197
        %1214 = vst [vmem:[#allocation3 + $0x130] sm:$0xff] %v1198
        %1215 = vst [vmem:[#allocation3 + $0x138] sm:$0xff] %v1199
        %1216 = vst [vmem:[#allocation3 + $0x140] sm:$0xff] %v1200
        %1217 = vst [vmem:[#allocation3 + $0x148] sm:$0xff] %v1201
        %1218 = vst [vmem:[#allocation3 + $0x150] sm:$0xff] %v1202
        %1219 = vst [vmem:[#allocation3 + $0x158] sm:$0xff] %v1203
        %1220 = vst [vmem:[#allocation3 + $0x160] sm:$0xff] %v1204
        %1221 = vst [vmem:[#allocation3 + $0x168] sm:$0xff] %v1205
        %1222 = vst [vmem:[#allocation3 + $0x170] sm:$0xff] %v1206
        %1223 = vst [vmem:[#allocation3 + $0x178] sm:$0xff] %v1207
        %v1224 = vld [vmem:[#allocation3] sm:$0xff]
        %v1225 = vld [vmem:[#allocation3 + $0x8] sm:$0xff]
        %v1226 = vld [vmem:[#allocation3 + $0x10] sm:$0xff]
        %v1227 = vld [vmem:[#allocation3 + $0x18] sm:$0xff]
        %v1228 = vld [vmem:[#allocation3 + $0x20] sm:$0xff]
        %v1229 = vld [vmem:[#allocation3 + $0x28] sm:$0xff]
        %v1230 = vld [vmem:[#allocation3 + $0x30] sm:$0xff]
        %v1231 = vld [vmem:[#allocation3 + $0x38] sm:$0xff]
        %v1232 = vld [vmem:[#allocation3 + $0x40] sm:$0xff]
        %v1233 = vld [vmem:[#allocation3 + $0x48] sm:$0xff]
        %v1234 = vld [vmem:[#allocation3 + $0x50] sm:$0xff]
        %v1235 = vld [vmem:[#allocation3 + $0x58] sm:$0xff]
        %v1236 = vld [vmem:[#allocation3 + $0x60] sm:$0xff]
        %v1237 = vld [vmem:[#allocation3 + $0x68] sm:$0xff]
        %v1238 = vld [vmem:[#allocation3 + $0x70] sm:$0xff]
        %v1239 = vld [vmem:[#allocation3 + $0x78] sm:$0xff]
        %v1240 = vld [vmem:[#allocation3 + $0x80] sm:$0xff]
        %v1241 = vld [vmem:[#allocation3 + $0x88] sm:$0xff]
        %v1242 = vld [vmem:[#allocation3 + $0x90] sm:$0xff]
        %v1243 = vld [vmem:[#allocation3 + $0x98] sm:$0xff]
        %v1244 = vld [vmem:[#allocation3 + $0xa0] sm:$0xff]
        %v1245 = vld [vmem:[#allocation3 + $0xa8] sm:$0xff]
        %v1246 = vld [vmem:[#allocation3 + $0xb0] sm:$0xff]
        %v1247 = vld [vmem:[#allocation3 + $0xb8] sm:$0xff]
        %v1248 = vld [vmem:[#allocation3 + $0xc0] sm:$0xff]
        %v1249 = vld [vmem:[#allocation3 + $0xc8] sm:$0xff]
        %v1250 = vld [vmem:[#allocation3 + $0xd0] sm:$0xff]
        %v1251 = vld [vmem:[#allocation3 + $0xd8] sm:$0xff]
        %v1252 = vld [vmem:[#allocation3 + $0xe0] sm:$0xff]
        %v1253 = vld [vmem:[#allocation3 + $0xe8] sm:$0xff]
        %v1254 = vld [vmem:[#allocation3 + $0xf0] sm:$0xff]
        %v1255 = vld [vmem:[#allocation3 + $0xf8] sm:$0xff]
        %v1256 = vld [vmem:[#allocation3 + $0x100] sm:$0xff]
        %v1257 = vld [vmem:[#allocation3 + $0x108] sm:$0xff]
        %v1258 = vld [vmem:[#allocation3 + $0x110] sm:$0xff]
        %v1259 = vld [vmem:[#allocation3 + $0x118] sm:$0xff]
        %v1260 = vld [vmem:[#allocation3 + $0x120] sm:$0xff]
        %v1261 = vld [vmem:[#allocation3 + $0x128] sm:$0xff]
        %v1262 = vld [vmem:[#allocation3 + $0x130] sm:$0xff]
        %v1263 = vld [vmem:[#allocation3 + $0x138] sm:$0xff]
        %v1264 = vld [vmem:[#allocation3 + $0x140] sm:$0xff]
        %v1265 = vld [vmem:[#allocation3 + $0x148] sm:$0xff]
        %v1266 = vld [vmem:[#allocation3 + $0x150] sm:$0xff]
        %v1267 = vld [vmem:[#allocation3 + $0x158] sm:$0xff]
        %v1268 = vld [vmem:[#allocation3 + $0x160] sm:$0xff]
        %v1269 = vld [vmem:[#allocation3 + $0x168] sm:$0xff]
        %v1270 = vld [vmem:[#allocation3 + $0x170] sm:$0xff]
        %v1271 = vld [vmem:[#allocation3 + $0x178] sm:$0xff]
        %s1272 = scalar_lea.vmem %s3, 128
        %v1273 = vld [vmem:[%s1272] sm:$0xff]
        %v1274 = vld [vmem:[%s1272 + $0x8] sm:$0xff]
        %v1275 = vld [vmem:[%s1272 + $0x10] sm:$0xff]
        %v1276 = vld [vmem:[%s1272 + $0x18] sm:$0xff]
        %v1277 = vld [vmem:[%s1272 + $0x20] sm:$0xff]
        %v1278 = vld [vmem:[%s1272 + $0x28] sm:$0xff]
        %v1279 = vld [vmem:[%s1272 + $0x30] sm:$0xff]
        %v1280 = vld [vmem:[%s1272 + $0x38] sm:$0xff]
        %v1281 = vld [vmem:[%s1272 + $0x40] sm:$0xff]
        %v1282 = vld [vmem:[%s1272 + $0x48] sm:$0xff]
        %v1283 = vld [vmem:[%s1272 + $0x50] sm:$0xff]
        %v1284 = vld [vmem:[%s1272 + $0x58] sm:$0xff]
        %v1285 = vld [vmem:[%s1272 + $0x60] sm:$0xff]
        %v1286 = vld [vmem:[%s1272 + $0x68] sm:$0xff]
        %v1287 = vld [vmem:[%s1272 + $0x70] sm:$0xff]
        %v1288 = vld [vmem:[%s1272 + $0x78] sm:$0xff]
        %v1289 = vld [vmem:[%s3] sm:$0xff]
        %v1290 = vld [vmem:[%s3 + $0x8] sm:$0xff]
        %v1291 = vld [vmem:[%s3 + $0x10] sm:$0xff]
        %v1292 = vld [vmem:[%s3 + $0x18] sm:$0xff]
        %v1293 = vld [vmem:[%s3 + $0x20] sm:$0xff]
        %v1294 = vld [vmem:[%s3 + $0x28] sm:$0xff]
        %v1295 = vld [vmem:[%s3 + $0x30] sm:$0xff]
        %v1296 = vld [vmem:[%s3 + $0x38] sm:$0xff]
        %v1297 = vld [vmem:[%s3 + $0x40] sm:$0xff]
        %v1298 = vld [vmem:[%s3 + $0x48] sm:$0xff]
        %v1299 = vld [vmem:[%s3 + $0x50] sm:$0xff]
        %v1300 = vld [vmem:[%s3 + $0x58] sm:$0xff]
        %v1301 = vld [vmem:[%s3 + $0x60] sm:$0xff]
        %v1302 = vld [vmem:[%s3 + $0x68] sm:$0xff]
        %v1303 = vld [vmem:[%s3 + $0x70] sm:$0xff]
        %v1304 = vld [vmem:[%s3 + $0x78] sm:$0xff]
        %1305 = vrot.lane.b32.xlu0 %v1224, 16
        %v1306 = vpop.permute.xlu0 %1305
        %1307 = vrot.lane.b32.xlu0 %v1226, 16
        %v1308 = vpop.permute.xlu0 %1307
        %1309 = vrot.lane.b32.xlu0 %v1228, 16
        %v1310 = vpop.permute.xlu0 %1309
        %1311 = vrot.lane.b32.xlu0 %v1230, 16
        %v1312 = vpop.permute.xlu0 %1311
        %1313 = vrot.lane.b32.xlu0 %v1232, 16
        %v1314 = vpop.permute.xlu0 %1313
        %1315 = vrot.lane.b32.xlu0 %v1234, 16
        %v1316 = vpop.permute.xlu0 %1315
        %1317 = vrot.lane.b32.xlu0 %v1236, 16
        %v1318 = vpop.permute.xlu0 %1317
        %1319 = vrot.lane.b32.xlu0 %v1238, 16
        %v1320 = vpop.permute.xlu0 %1319
        %1321 = vrot.lane.b32.xlu0 %v1240, 16
        %v1322 = vpop.permute.xlu0 %1321
        %1323 = vrot.lane.b32.xlu0 %v1242, 16
        %v1324 = vpop.permute.xlu0 %1323
        %1325 = vrot.lane.b32.xlu0 %v1244, 16
        %v1326 = vpop.permute.xlu0 %1325
        %1327 = vrot.lane.b32.xlu0 %v1246, 16
        %v1328 = vpop.permute.xlu0 %1327
        %1329 = vrot.lane.b32.xlu0 %v1248, 16
        %v1330 = vpop.permute.xlu0 %1329
        %1331 = vrot.lane.b32.xlu0 %v1250, 16
        %v1332 = vpop.permute.xlu0 %1331
        %1333 = vrot.lane.b32.xlu0 %v1252, 16
        %v1334 = vpop.permute.xlu0 %1333
        %1335 = vrot.lane.b32.xlu0 %v1254, 16
        %v1336 = vpop.permute.xlu0 %1335
        %1337 = vrot.lane.b32.xlu0 %v1256, 16
        %v1338 = vpop.permute.xlu0 %1337
        %1339 = vrot.lane.b32.xlu0 %v1258, 16
        %v1340 = vpop.permute.xlu0 %1339
        %1341 = vrot.lane.b32.xlu0 %v1260, 16
        %v1342 = vpop.permute.xlu0 %1341
        %1343 = vrot.lane.b32.xlu0 %v1262, 16
        %v1344 = vpop.permute.xlu0 %1343
        %1345 = vrot.lane.b32.xlu0 %v1264, 16
        %v1346 = vpop.permute.xlu0 %1345
        %1347 = vrot.lane.b32.xlu0 %v1266, 16
        %v1348 = vpop.permute.xlu0 %1347
        %1349 = vrot.lane.b32.xlu0 %v1268, 16
        %v1350 = vpop.permute.xlu0 %1349
        %1351 = vrot.lane.b32.xlu0 %v1270, 16
        %v1352 = vpop.permute.xlu0 %1351
        %1353 = vrot.lane.b32.xlu0 %v1225, 16
        %v1354 = vpop.permute.xlu0 %1353
        %1355 = vrot.lane.b32.xlu0 %v1227, 16
        %v1356 = vpop.permute.xlu0 %1355
        %1357 = vrot.lane.b32.xlu0 %v1229, 16
        %v1358 = vpop.permute.xlu0 %1357
        %1359 = vrot.lane.b32.xlu0 %v1231, 16
        %v1360 = vpop.permute.xlu0 %1359
        %1361 = vrot.lane.b32.xlu0 %v1233, 16
        %v1362 = vpop.permute.xlu0 %1361
        %1363 = vrot.lane.b32.xlu0 %v1235, 16
        %v1364 = vpop.permute.xlu0 %1363
        %1365 = vrot.lane.b32.xlu0 %v1237, 16
        %v1366 = vpop.permute.xlu0 %1365
        %1367 = vrot.lane.b32.xlu0 %v1239, 16
        %v1368 = vpop.permute.xlu0 %1367
        %1369 = vrot.lane.b32.xlu0 %v1241, 16
        %v1370 = vpop.permute.xlu0 %1369
        %1371 = vrot.lane.b32.xlu0 %v1243, 16
        %v1372 = vpop.permute.xlu0 %1371
        %1373 = vrot.lane.b32.xlu0 %v1245, 16
        %v1374 = vpop.permute.xlu0 %1373
        %1375 = vrot.lane.b32.xlu0 %v1247, 16
        %v1376 = vpop.permute.xlu0 %1375
        %1377 = vrot.lane.b32.xlu0 %v1249, 16
        %v1378 = vpop.permute.xlu0 %1377
        %1379 = vrot.lane.b32.xlu0 %v1251, 16
        %v1380 = vpop.permute.xlu0 %1379
        %1381 = vrot.lane.b32.xlu0 %v1253, 16
        %v1382 = vpop.permute.xlu0 %1381
        %1383 = vrot.lane.b32.xlu0 %v1255, 16
        %v1384 = vpop.permute.xlu0 %1383
        %1385 = vrot.lane.b32.xlu0 %v1257, 16
        %v1386 = vpop.permute.xlu0 %1385
        %1387 = vrot.lane.b32.xlu0 %v1259, 16
        %v1388 = vpop.permute.xlu0 %1387
        %1389 = vrot.lane.b32.xlu0 %v1261, 16
        %v1390 = vpop.permute.xlu0 %1389
        %1391 = vrot.lane.b32.xlu0 %v1263, 16
        %v1392 = vpop.permute.xlu0 %1391
        %1393 = vrot.lane.b32.xlu0 %v1265, 16
        %v1394 = vpop.permute.xlu0 %1393
        %1395 = vrot.lane.b32.xlu0 %v1267, 16
        %v1396 = vpop.permute.xlu0 %1395
        %1397 = vrot.lane.b32.xlu0 %v1269, 16
        %v1398 = vpop.permute.xlu0 %1397
        %1399 = vrot.lane.b32.xlu0 %v1271, 16
        %v1400 = vpop.permute.xlu0 %1399
        %v1401 = vsel %vm409, %v1306, %v1354
        %v1402 = vsel %vm409, %v1308, %v1356
        %v1403 = vsel %vm409, %v1310, %v1358
        %v1404 = vsel %vm409, %v1312, %v1360
        %v1405 = vsel %vm409, %v1314, %v1362
        %v1406 = vsel %vm409, %v1316, %v1364
        %v1407 = vsel %vm409, %v1318, %v1366
        %v1408 = vsel %vm409, %v1320, %v1368
        %v1409 = vsel %vm409, %v1322, %v1370
        %v1410 = vsel %vm409, %v1324, %v1372
        %v1411 = vsel %vm409, %v1326, %v1374
        %v1412 = vsel %vm409, %v1328, %v1376
        %v1413 = vsel %vm409, %v1330, %v1378
        %v1414 = vsel %vm409, %v1332, %v1380
        %v1415 = vsel %vm409, %v1334, %v1382
        %v1416 = vsel %vm409, %v1336, %v1384
        %v1417 = vsel %vm409, %v1338, %v1386
        %v1418 = vsel %vm409, %v1340, %v1388
        %v1419 = vsel %vm409, %v1342, %v1390
        %v1420 = vsel %vm409, %v1344, %v1392
        %v1421 = vsel %vm409, %v1346, %v1394
        %v1422 = vsel %vm409, %v1348, %v1396
        %v1423 = vsel %vm409, %v1350, %v1398
        %v1424 = vsel %vm409, %v1352, %v1400
        %v1425 = vsel %vm409, %v1354, %v1306
        %v1426 = vsel %vm409, %v1356, %v1308
        %v1427 = vsel %vm409, %v1358, %v1310
        %v1428 = vsel %vm409, %v1360, %v1312
        %v1429 = vsel %vm409, %v1362, %v1314
        %v1430 = vsel %vm409, %v1364, %v1316
        %v1431 = vsel %vm409, %v1366, %v1318
        %v1432 = vsel %vm409, %v1368, %v1320
        %v1433 = vsel %vm409, %v1370, %v1322
        %v1434 = vsel %vm409, %v1372, %v1324
        %v1435 = vsel %vm409, %v1374, %v1326
        %v1436 = vsel %vm409, %v1376, %v1328
        %v1437 = vsel %vm409, %v1378, %v1330
        %v1438 = vsel %vm409, %v1380, %v1332
        %v1439 = vsel %vm409, %v1382, %v1334
        %v1440 = vsel %vm409, %v1384, %v1336
        %v1441 = vsel %vm409, %v1386, %v1338
        %v1442 = vsel %vm409, %v1388, %v1340
        %v1443 = vsel %vm409, %v1390, %v1342
        %v1444 = vsel %vm409, %v1392, %v1344
        %v1445 = vsel %vm409, %v1394, %v1346
        %v1446 = vsel %vm409, %v1396, %v1348
        %v1447 = vsel %vm409, %v1398, %v1350
        %v1448 = vsel %vm409, %v1400, %v1352
        %vm1449 = vcmask 523264
        %v1451 = vsel %vm1449, %v1290, 0
        %v1454 = vsel %vm1449, %v1292, 0
        %v1457 = vsel %vm1449, %v1294, 0
        %v1460 = vsel %vm1449, %v1296, 0
        %v1463 = vsel %vm1449, %v1298, 0
        %v1466 = vsel %vm1449, %v1300, 0
        %v1469 = vsel %vm1449, %v1302, 0
        %v1472 = vsel %vm1449, %v1304, 0
        %1474 = vmatprep.subr.mxu0 %v1416
        %1475 = vmatpush1.msra.mxu0 %v1440
        %1476 = vmatprep.subr.mxu0 %v1415
        %1477 = vmatpush1.msra.mxu0 %v1439
        %1478 = vmatprep.subr.mxu0 %v1414
        %1479 = vmatpush1.msra.mxu0 %v1438
        %1480 = vmatprep.subr.mxu0 %v1413
        %1481 = vmatpush1.msra.mxu0 %v1437
        %1482 = vmatprep.subr.mxu0 %v1412
        %1483 = vmatpush1.msra.mxu0 %v1436
        %1484 = vmatprep.subr.mxu0 %v1411
        %1485 = vmatpush1.msra.mxu0 %v1435
        %1486 = vmatprep.subr.mxu0 %v1410
        %1487 = vmatpush1.msra.mxu0 %v1434
        %1488 = vmatprep.subr.mxu0 %v1409
        %1489 = vmatpush1.msra.mxu0 %v1433
        %1490 = vmatprep.subr.mxu0 %v1408
        %1491 = vmatpush1.msra.mxu0 %v1432
        %1492 = vmatprep.subr.mxu0 %v1407
        %1493 = vmatpush1.msra.mxu0 %v1431
        %1494 = vmatprep.subr.mxu0 %v1406
        %1495 = vmatpush1.msra.mxu0 %v1430
        %1496 = vmatprep.subr.mxu0 %v1405
        %1497 = vmatpush1.msra.mxu0 %v1429
        %1498 = vmatprep.subr.mxu0 %v1404
        %1499 = vmatpush1.msra.mxu0 %v1428
        %1500 = vmatprep.subr.mxu0 %v1403
        %1501 = vmatpush1.msra.mxu0 %v1427
        %1502 = vmatprep.subr.mxu0 %v1402
        %1503 = vmatpush1.msra.mxu0 %v1426
        %1504 = vmatprep.subr.mxu0 %v1401
        %1505 = vmatpush1.msra.mxu0 %v1425
        %1506 = vmatprep.subr.mxu0 0.0
        %1507 = vmatpush2.msra.mxu0 0.0
        %1508 = vmatprep.subr.mxu0 0.0
        %1509 = vmatpush2.msra.mxu0 0.0
        %1510 = vmatprep.subr.mxu0 0.0
        %1511 = vmatpush2.msra.mxu0 0.0
        %1512 = vmatprep.subr.mxu0 0.0
        %1513 = vmatpush2.msra.mxu0 0.0
        %1514 = vmatprep.subr.mxu0 0.0
        %1515 = vmatpush2.msra.mxu0 0.0
        %1516 = vmatprep.subr.mxu0 0.0
        %1517 = vmatpush2.msra.mxu0 0.0
        %1518 = vmatprep.subr.mxu0 0.0
        %1519 = vmatpush2.msra.mxu0 0.0
        %1520 = vmatprep.subr.mxu0 0.0
        %1521 = vmatpush2.msra.mxu0 0.0
        %1522 = vmatprep.subr.mxu0 %v1424
        %1523 = vmatpush2.msra.mxu0 %v1448
        %1524 = vmatprep.subr.mxu0 %v1423
        %1525 = vmatpush2.msra.mxu0 %v1447
        %1526 = vmatprep.subr.mxu0 %v1422
        %1527 = vmatpush2.msra.mxu0 %v1446
        %1528 = vmatprep.subr.mxu0 %v1421
        %1529 = vmatpush2.msra.mxu0 %v1445
        %1530 = vmatprep.subr.mxu0 %v1420
        %1531 = vmatpush2.msra.mxu0 %v1444
        %1532 = vmatprep.subr.mxu0 %v1419
        %1533 = vmatpush2.msra.mxu0 %v1443
        %1534 = vmatprep.subr.mxu0 %v1418
        %1535 = vmatpush2.msra.mxu0 %v1442
        %1536 = vmatprep.subr.mxu0 %v1417
        %1537 = vmatpush2.msra.mxu0 %v1441
        %1538 = vmatprep.mubr.f32.mxu0 %v1451
        %1539 = vmatmul.mubr.f32.gmra.mxu0 %v1289
        %v1540 = vpop.f32.mrf.mxu0
        %v1541 = vadd.f32 0.0, %v1540
        %v1542 = vpop.f32.mrf.mxu0
        %v1543 = vadd.f32 0.0, %v1542
        %1544 = vmatprep.mubr.f32.mxu0 %v1454
        %1545 = vmatmul.mubr.f32.gmra.mxu0 %v1291
        %v1546 = vpop.f32.mrf.mxu0
        %v1547 = vadd.f32 0.0, %v1546
        %v1548 = vpop.f32.mrf.mxu0
        %v1549 = vadd.f32 0.0, %v1548
        %1550 = vmatprep.mubr.f32.mxu0 %v1457
        %1551 = vmatmul.mubr.f32.gmra.mxu0 %v1293
        %v1552 = vpop.f32.mrf.mxu0
        %v1553 = vadd.f32 0.0, %v1552
        %v1554 = vpop.f32.mrf.mxu0
        %v1555 = vadd.f32 0.0, %v1554
        %1556 = vmatprep.mubr.f32.mxu0 %v1460
        %1557 = vmatmul.mubr.f32.gmra.mxu0 %v1295
        %v1558 = vpop.f32.mrf.mxu0
        %v1559 = vadd.f32 0.0, %v1558
        %v1560 = vpop.f32.mrf.mxu0
        %v1561 = vadd.f32 0.0, %v1560
        %1562 = vmatprep.mubr.f32.mxu0 %v1463
        %1563 = vmatmul.mubr.f32.gmra.mxu0 %v1297
        %v1564 = vpop.f32.mrf.mxu0
        %v1565 = vadd.f32 0.0, %v1564
        %v1566 = vpop.f32.mrf.mxu0
        %v1567 = vadd.f32 0.0, %v1566
        %1568 = vmatprep.mubr.f32.mxu0 %v1466
        %1569 = vmatmul.mubr.f32.gmra.mxu0 %v1299
        %v1570 = vpop.f32.mrf.mxu0
        %v1571 = vadd.f32 0.0, %v1570
        %v1572 = vpop.f32.mrf.mxu0
        %v1573 = vadd.f32 0.0, %v1572
        %1574 = vmatprep.mubr.f32.mxu0 %v1469
        %1575 = vmatmul.mubr.f32.gmra.mxu0 %v1301
        %v1576 = vpop.f32.mrf.mxu0
        %v1577 = vadd.f32 0.0, %v1576
        %v1578 = vpop.f32.mrf.mxu0
        %v1579 = vadd.f32 0.0, %v1578
        %1580 = vmatprep.mubr.f32.mxu0 %v1472
        %1581 = vmatmul.mubr.f32.gmra.mxu0 %v1303
        %v1582 = vpop.f32.mrf.mxu0
        %v1583 = vadd.f32 0.0, %v1582
        %v1584 = vpop.f32.mrf.mxu0
        %v1585 = vadd.f32 0.0, %v1584
        %1586 = vdwg.mxu0
        %v1588 = vsel %vm1449, %v1274, 0
        %v1591 = vsel %vm1449, %v1276, 0
        %v1594 = vsel %vm1449, %v1278, 0
        %v1597 = vsel %vm1449, %v1280, 0
        %v1600 = vsel %vm1449, %v1282, 0
        %v1603 = vsel %vm1449, %v1284, 0
        %v1606 = vsel %vm1449, %v1286, 0
        %v1609 = vsel %vm1449, %v1288, 0
        %1611 = vmatprep.subr.mxu0 %v1255
        %1612 = vmatpush1.msra.mxu0 %v1254
        %1613 = vmatprep.subr.mxu0 %v1253
        %1614 = vmatpush1.msra.mxu0 %v1252
        %1615 = vmatprep.subr.mxu0 %v1251
        %1616 = vmatpush1.msra.mxu0 %v1250
        %1617 = vmatprep.subr.mxu0 %v1249
        %1618 = vmatpush1.msra.mxu0 %v1248
        %1619 = vmatprep.subr.mxu0 %v1247
        %1620 = vmatpush1.msra.mxu0 %v1246
        %1621 = vmatprep.subr.mxu0 %v1245
        %1622 = vmatpush1.msra.mxu0 %v1244
        %1623 = vmatprep.subr.mxu0 %v1243
        %1624 = vmatpush1.msra.mxu0 %v1242
        %1625 = vmatprep.subr.mxu0 %v1241
        %1626 = vmatpush1.msra.mxu0 %v1240
        %1627 = vmatprep.subr.mxu0 %v1239
        %1628 = vmatpush1.msra.mxu0 %v1238
        %1629 = vmatprep.subr.mxu0 %v1237
        %1630 = vmatpush1.msra.mxu0 %v1236
        %1631 = vmatprep.subr.mxu0 %v1235
        %1632 = vmatpush1.msra.mxu0 %v1234
        %1633 = vmatprep.subr.mxu0 %v1233
        %1634 = vmatpush1.msra.mxu0 %v1232
        %1635 = vmatprep.subr.mxu0 %v1231
        %1636 = vmatpush1.msra.mxu0 %v1230
        %1637 = vmatprep.subr.mxu0 %v1229
        %1638 = vmatpush1.msra.mxu0 %v1228
        %1639 = vmatprep.subr.mxu0 %v1227
        %1640 = vmatpush1.msra.mxu0 %v1226
        %1641 = vmatprep.subr.mxu0 %v1225
        %1642 = vmatpush1.msra.mxu0 %v1224
        %1643 = vmatprep.subr.mxu0 0.0
        %1644 = vmatpush2.msra.mxu0 0.0
        %1645 = vmatprep.subr.mxu0 0.0
        %1646 = vmatpush2.msra.mxu0 0.0
        %1647 = vmatprep.subr.mxu0 0.0
        %1648 = vmatpush2.msra.mxu0 0.0
        %1649 = vmatprep.subr.mxu0 0.0
        %1650 = vmatpush2.msra.mxu0 0.0
        %1651 = vmatprep.subr.mxu0 0.0
        %1652 = vmatpush2.msra.mxu0 0.0
        %1653 = vmatprep.subr.mxu0 0.0
        %1654 = vmatpush2.msra.mxu0 0.0
        %1655 = vmatprep.subr.mxu0 0.0
        %1656 = vmatpush2.msra.mxu0 0.0
        %1657 = vmatprep.subr.mxu0 0.0
        %1658 = vmatpush2.msra.mxu0 0.0
        %1659 = vmatprep.subr.mxu0 %v1271
        %1660 = vmatpush2.msra.mxu0 %v1270
        %1661 = vmatprep.subr.mxu0 %v1269
        %1662 = vmatpush2.msra.mxu0 %v1268
        %1663 = vmatprep.subr.mxu0 %v1267
        %1664 = vmatpush2.msra.mxu0 %v1266
        %1665 = vmatprep.subr.mxu0 %v1265
        %1666 = vmatpush2.msra.mxu0 %v1264
        %1667 = vmatprep.subr.mxu0 %v1263
        %1668 = vmatpush2.msra.mxu0 %v1262
        %1669 = vmatprep.subr.mxu0 %v1261
        %1670 = vmatpush2.msra.mxu0 %v1260
        %1671 = vmatprep.subr.mxu0 %v1259
        %1672 = vmatpush2.msra.mxu0 %v1258
        %1673 = vmatprep.subr.mxu0 %v1257
        %1674 = vmatpush2.msra.mxu0 %v1256
        %1675 = vmatprep.mubr.f32.mxu0 %v1588
        %1676 = vmatmul.mubr.f32.gmra.mxu0 %v1273
        %v1677 = vpop.f32.mrf.mxu0
        %v1678 = vadd.f32 %v1541, %v1677
        %v1679 = vpop.f32.mrf.mxu0
        %v1680 = vadd.f32 %v1543, %v1679
        %1681 = vmatprep.mubr.f32.mxu0 %v1591
        %1682 = vmatmul.mubr.f32.gmra.mxu0 %v1275
        %v1683 = vpop.f32.mrf.mxu0
        %v1684 = vadd.f32 %v1547, %v1683
        %v1685 = vpop.f32.mrf.mxu0
        %v1686 = vadd.f32 %v1549, %v1685
        %1687 = vmatprep.mubr.f32.mxu0 %v1594
        %1688 = vmatmul.mubr.f32.gmra.mxu0 %v1277
        %v1689 = vpop.f32.mrf.mxu0
        %v1690 = vadd.f32 %v1553, %v1689
        %v1691 = vpop.f32.mrf.mxu0
        %v1692 = vadd.f32 %v1555, %v1691
        %1693 = vmatprep.mubr.f32.mxu0 %v1597
        %1694 = vmatmul.mubr.f32.gmra.mxu0 %v1279
        %v1695 = vpop.f32.mrf.mxu0
        %v1696 = vadd.f32 %v1559, %v1695
        %v1697 = vpop.f32.mrf.mxu0
        %v1698 = vadd.f32 %v1561, %v1697
        %1699 = vmatprep.mubr.f32.mxu0 %v1600
        %1700 = vmatmul.mubr.f32.gmra.mxu0 %v1281
        %v1701 = vpop.f32.mrf.mxu0
        %v1702 = vadd.f32 %v1565, %v1701
        %v1703 = vpop.f32.mrf.mxu0
        %v1704 = vadd.f32 %v1567, %v1703
        %1705 = vmatprep.mubr.f32.mxu0 %v1603
        %1706 = vmatmul.mubr.f32.gmra.mxu0 %v1283
        %v1707 = vpop.f32.mrf.mxu0
        %v1708 = vadd.f32 %v1571, %v1707
        %v1709 = vpop.f32.mrf.mxu0
        %v1710 = vadd.f32 %v1573, %v1709
        %1711 = vmatprep.mubr.f32.mxu0 %v1606
        %1712 = vmatmul.mubr.f32.gmra.mxu0 %v1285
        %v1713 = vpop.f32.mrf.mxu0
        %v1714 = vadd.f32 %v1577, %v1713
        %v1715 = vpop.f32.mrf.mxu0
        %v1716 = vadd.f32 %v1579, %v1715
        %1717 = vmatprep.mubr.f32.mxu0 %v1609
        %1718 = vmatmul.mubr.f32.gmra.mxu0 %v1287
        %v1719 = vpop.f32.mrf.mxu0
        %v1720 = vadd.f32 %v1583, %v1719
        %v1721 = vpop.f32.mrf.mxu0
        %v1722 = vadd.f32 %v1585, %v1721
        %1723 = vdwg.mxu0
        %s1724 = scalar_lea.vmem %s3, 256
        %v1725 = vld [vmem:[%s1724] sm:$0xff]
        %v1726 = vld [vmem:[%s1724 + $0x8] sm:$0xff]
        %v1727 = vld [vmem:[%s1724 + $0x10] sm:$0xff]
        %v1728 = vld [vmem:[%s1724 + $0x18] sm:$0xff]
        %v1729 = vld [vmem:[%s1724 + $0x20] sm:$0xff]
        %v1730 = vld [vmem:[%s1724 + $0x28] sm:$0xff]
        %v1731 = vld [vmem:[%s1724 + $0x30] sm:$0xff]
        %v1732 = vld [vmem:[%s1724 + $0x38] sm:$0xff]
        %v1733 = vld [vmem:[%s1724 + $0x40] sm:$0xff]
        %v1734 = vld [vmem:[%s1724 + $0x48] sm:$0xff]
        %v1735 = vld [vmem:[%s1724 + $0x50] sm:$0xff]
        %v1736 = vld [vmem:[%s1724 + $0x58] sm:$0xff]
        %v1737 = vld [vmem:[%s1724 + $0x60] sm:$0xff]
        %v1738 = vld [vmem:[%s1724 + $0x68] sm:$0xff]
        %v1739 = vld [vmem:[%s1724 + $0x70] sm:$0xff]
        %v1740 = vld [vmem:[%s1724 + $0x78] sm:$0xff]
        %1741 = vrot.lane.b32.xlu0 %v1224, 112
        %v1742 = vpop.permute.xlu0 %1741
        %1743 = vrot.lane.b32.xlu0 %v1226, 112
        %v1744 = vpop.permute.xlu0 %1743
        %1745 = vrot.lane.b32.xlu0 %v1228, 112
        %v1746 = vpop.permute.xlu0 %1745
        %1747 = vrot.lane.b32.xlu0 %v1230, 112
        %v1748 = vpop.permute.xlu0 %1747
        %1749 = vrot.lane.b32.xlu0 %v1232, 112
        %v1750 = vpop.permute.xlu0 %1749
        %1751 = vrot.lane.b32.xlu0 %v1234, 112
        %v1752 = vpop.permute.xlu0 %1751
        %1753 = vrot.lane.b32.xlu0 %v1236, 112
        %v1754 = vpop.permute.xlu0 %1753
        %1755 = vrot.lane.b32.xlu0 %v1238, 112
        %v1756 = vpop.permute.xlu0 %1755
        %1757 = vrot.lane.b32.xlu0 %v1240, 112
        %v1758 = vpop.permute.xlu0 %1757
        %1759 = vrot.lane.b32.xlu0 %v1242, 112
        %v1760 = vpop.permute.xlu0 %1759
        %1761 = vrot.lane.b32.xlu0 %v1244, 112
        %v1762 = vpop.permute.xlu0 %1761
        %1763 = vrot.lane.b32.xlu0 %v1246, 112
        %v1764 = vpop.permute.xlu0 %1763
        %1765 = vrot.lane.b32.xlu0 %v1248, 112
        %v1766 = vpop.permute.xlu0 %1765
        %1767 = vrot.lane.b32.xlu0 %v1250, 112
        %v1768 = vpop.permute.xlu0 %1767
        %1769 = vrot.lane.b32.xlu0 %v1252, 112
        %v1770 = vpop.permute.xlu0 %1769
        %1771 = vrot.lane.b32.xlu0 %v1254, 112
        %v1772 = vpop.permute.xlu0 %1771
        %1773 = vrot.lane.b32.xlu0 %v1256, 112
        %v1774 = vpop.permute.xlu0 %1773
        %1775 = vrot.lane.b32.xlu0 %v1258, 112
        %v1776 = vpop.permute.xlu0 %1775
        %1777 = vrot.lane.b32.xlu0 %v1260, 112
        %v1778 = vpop.permute.xlu0 %1777
        %1779 = vrot.lane.b32.xlu0 %v1262, 112
        %v1780 = vpop.permute.xlu0 %1779
        %1781 = vrot.lane.b32.xlu0 %v1264, 112
        %v1782 = vpop.permute.xlu0 %1781
        %1783 = vrot.lane.b32.xlu0 %v1266, 112
        %v1784 = vpop.permute.xlu0 %1783
        %1785 = vrot.lane.b32.xlu0 %v1268, 112
        %v1786 = vpop.permute.xlu0 %1785
        %1787 = vrot.lane.b32.xlu0 %v1270, 112
        %v1788 = vpop.permute.xlu0 %1787
        %1789 = vrot.lane.b32.xlu0 %v1225, 112
        %v1790 = vpop.permute.xlu0 %1789
        %1791 = vrot.lane.b32.xlu0 %v1227, 112
        %v1792 = vpop.permute.xlu0 %1791
        %1793 = vrot.lane.b32.xlu0 %v1229, 112
        %v1794 = vpop.permute.xlu0 %1793
        %1795 = vrot.lane.b32.xlu0 %v1231, 112
        %v1796 = vpop.permute.xlu0 %1795
        %1797 = vrot.lane.b32.xlu0 %v1233, 112
        %v1798 = vpop.permute.xlu0 %1797
        %1799 = vrot.lane.b32.xlu0 %v1235, 112
        %v1800 = vpop.permute.xlu0 %1799
        %1801 = vrot.lane.b32.xlu0 %v1237, 112
        %v1802 = vpop.permute.xlu0 %1801
        %1803 = vrot.lane.b32.xlu0 %v1239, 112
        %v1804 = vpop.permute.xlu0 %1803
        %1805 = vrot.lane.b32.xlu0 %v1241, 112
        %v1806 = vpop.permute.xlu0 %1805
        %1807 = vrot.lane.b32.xlu0 %v1243, 112
        %v1808 = vpop.permute.xlu0 %1807
        %1809 = vrot.lane.b32.xlu0 %v1245, 112
        %v1810 = vpop.permute.xlu0 %1809
        %1811 = vrot.lane.b32.xlu0 %v1247, 112
        %v1812 = vpop.permute.xlu0 %1811
        %1813 = vrot.lane.b32.xlu0 %v1249, 112
        %v1814 = vpop.permute.xlu0 %1813
        %1815 = vrot.lane.b32.xlu0 %v1251, 112
        %v1816 = vpop.permute.xlu0 %1815
        %1817 = vrot.lane.b32.xlu0 %v1253, 112
        %v1818 = vpop.permute.xlu0 %1817
        %1819 = vrot.lane.b32.xlu0 %v1255, 112
        %v1820 = vpop.permute.xlu0 %1819
        %1821 = vrot.lane.b32.xlu0 %v1257, 112
        %v1822 = vpop.permute.xlu0 %1821
        %1823 = vrot.lane.b32.xlu0 %v1259, 112
        %v1824 = vpop.permute.xlu0 %1823
        %1825 = vrot.lane.b32.xlu0 %v1261, 112
        %v1826 = vpop.permute.xlu0 %1825
        %1827 = vrot.lane.b32.xlu0 %v1263, 112
        %v1828 = vpop.permute.xlu0 %1827
        %1829 = vrot.lane.b32.xlu0 %v1265, 112
        %v1830 = vpop.permute.xlu0 %1829
        %1831 = vrot.lane.b32.xlu0 %v1267, 112
        %v1832 = vpop.permute.xlu0 %1831
        %1833 = vrot.lane.b32.xlu0 %v1269, 112
        %v1834 = vpop.permute.xlu0 %1833
        %1835 = vrot.lane.b32.xlu0 %v1271, 112
        %v1836 = vpop.permute.xlu0 %1835
        %v1837 = vsel %vm712, %v1742, %v1790
        %v1838 = vsel %vm712, %v1744, %v1792
        %v1839 = vsel %vm712, %v1746, %v1794
        %v1840 = vsel %vm712, %v1748, %v1796
        %v1841 = vsel %vm712, %v1750, %v1798
        %v1842 = vsel %vm712, %v1752, %v1800
        %v1843 = vsel %vm712, %v1754, %v1802
        %v1844 = vsel %vm712, %v1756, %v1804
        %v1845 = vsel %vm712, %v1758, %v1806
        %v1846 = vsel %vm712, %v1760, %v1808
        %v1847 = vsel %vm712, %v1762, %v1810
        %v1848 = vsel %vm712, %v1764, %v1812
        %v1849 = vsel %vm712, %v1766, %v1814
        %v1850 = vsel %vm712, %v1768, %v1816
        %v1851 = vsel %vm712, %v1770, %v1818
        %v1852 = vsel %vm712, %v1772, %v1820
        %v1853 = vsel %vm712, %v1774, %v1822
        %v1854 = vsel %vm712, %v1776, %v1824
        %v1855 = vsel %vm712, %v1778, %v1826
        %v1856 = vsel %vm712, %v1780, %v1828
        %v1857 = vsel %vm712, %v1782, %v1830
        %v1858 = vsel %vm712, %v1784, %v1832
        %v1859 = vsel %vm712, %v1786, %v1834
        %v1860 = vsel %vm712, %v1788, %v1836
        %v1861 = vsel %vm712, %v1790, %v1742
        %v1862 = vsel %vm712, %v1792, %v1744
        %v1863 = vsel %vm712, %v1794, %v1746
        %v1864 = vsel %vm712, %v1796, %v1748
        %v1865 = vsel %vm712, %v1798, %v1750
        %v1866 = vsel %vm712, %v1800, %v1752
        %v1867 = vsel %vm712, %v1802, %v1754
        %v1868 = vsel %vm712, %v1804, %v1756
        %v1869 = vsel %vm712, %v1806, %v1758
        %v1870 = vsel %vm712, %v1808, %v1760
        %v1871 = vsel %vm712, %v1810, %v1762
        %v1872 = vsel %vm712, %v1812, %v1764
        %v1873 = vsel %vm712, %v1814, %v1766
        %v1874 = vsel %vm712, %v1816, %v1768
        %v1875 = vsel %vm712, %v1818, %v1770
        %v1876 = vsel %vm712, %v1820, %v1772
        %v1877 = vsel %vm712, %v1822, %v1774
        %v1878 = vsel %vm712, %v1824, %v1776
        %v1879 = vsel %vm712, %v1826, %v1778
        %v1880 = vsel %vm712, %v1828, %v1780
        %v1881 = vsel %vm712, %v1830, %v1782
        %v1882 = vsel %vm712, %v1832, %v1784
        %v1883 = vsel %vm712, %v1834, %v1786
        %v1884 = vsel %vm712, %v1836, %v1788
        %v1886 = vsel %vm1449, %v1726, 0
        %v1889 = vsel %vm1449, %v1728, 0
        %v1892 = vsel %vm1449, %v1730, 0
        %v1895 = vsel %vm1449, %v1732, 0
        %v1898 = vsel %vm1449, %v1734, 0
        %v1901 = vsel %vm1449, %v1736, 0
        %v1904 = vsel %vm1449, %v1738, 0
        %v1907 = vsel %vm1449, %v1740, 0
        %1909 = vmatprep.subr.mxu0 %v1876
        %1910 = vmatpush1.msra.mxu0 %v1852
        %1911 = vmatprep.subr.mxu0 %v1875
        %1912 = vmatpush1.msra.mxu0 %v1851
        %1913 = vmatprep.subr.mxu0 %v1874
        %1914 = vmatpush1.msra.mxu0 %v1850
        %1915 = vmatprep.subr.mxu0 %v1873
        %1916 = vmatpush1.msra.mxu0 %v1849
        %1917 = vmatprep.subr.mxu0 %v1872
        %1918 = vmatpush1.msra.mxu0 %v1848
        %1919 = vmatprep.subr.mxu0 %v1871
        %1920 = vmatpush1.msra.mxu0 %v1847
        %1921 = vmatprep.subr.mxu0 %v1870
        %1922 = vmatpush1.msra.mxu0 %v1846
        %1923 = vmatprep.subr.mxu0 %v1869
        %1924 = vmatpush1.msra.mxu0 %v1845
        %1925 = vmatprep.subr.mxu0 %v1868
        %1926 = vmatpush1.msra.mxu0 %v1844
        %1927 = vmatprep.subr.mxu0 %v1867
        %1928 = vmatpush1.msra.mxu0 %v1843
        %1929 = vmatprep.subr.mxu0 %v1866
        %1930 = vmatpush1.msra.mxu0 %v1842
        %1931 = vmatprep.subr.mxu0 %v1865
        %1932 = vmatpush1.msra.mxu0 %v1841
        %1933 = vmatprep.subr.mxu0 %v1864
        %1934 = vmatpush1.msra.mxu0 %v1840
        %1935 = vmatprep.subr.mxu0 %v1863
        %1936 = vmatpush1.msra.mxu0 %v1839
        %1937 = vmatprep.subr.mxu0 %v1862
        %1938 = vmatpush1.msra.mxu0 %v1838
        %1939 = vmatprep.subr.mxu0 %v1861
        %1940 = vmatpush1.msra.mxu0 %v1837
        %1941 = vmatprep.subr.mxu0 0.0
        %1942 = vmatpush2.msra.mxu0 0.0
        %1943 = vmatprep.subr.mxu0 0.0
        %1944 = vmatpush2.msra.mxu0 0.0
        %1945 = vmatprep.subr.mxu0 0.0
        %1946 = vmatpush2.msra.mxu0 0.0
        %1947 = vmatprep.subr.mxu0 0.0
        %1948 = vmatpush2.msra.mxu0 0.0
        %1949 = vmatprep.subr.mxu0 0.0
        %1950 = vmatpush2.msra.mxu0 0.0
        %1951 = vmatprep.subr.mxu0 0.0
        %1952 = vmatpush2.msra.mxu0 0.0
        %1953 = vmatprep.subr.mxu0 0.0
        %1954 = vmatpush2.msra.mxu0 0.0
        %1955 = vmatprep.subr.mxu0 0.0
        %1956 = vmatpush2.msra.mxu0 0.0
        %1957 = vmatprep.subr.mxu0 %v1884
        %1958 = vmatpush2.msra.mxu0 %v1860
        %1959 = vmatprep.subr.mxu0 %v1883
        %1960 = vmatpush2.msra.mxu0 %v1859
        %1961 = vmatprep.subr.mxu0 %v1882
        %1962 = vmatpush2.msra.mxu0 %v1858
        %1963 = vmatprep.subr.mxu0 %v1881
        %1964 = vmatpush2.msra.mxu0 %v1857
        %1965 = vmatprep.subr.mxu0 %v1880
        %1966 = vmatpush2.msra.mxu0 %v1856
        %1967 = vmatprep.subr.mxu0 %v1879
        %1968 = vmatpush2.msra.mxu0 %v1855
        %1969 = vmatprep.subr.mxu0 %v1878
        %1970 = vmatpush2.msra.mxu0 %v1854
        %1971 = vmatprep.subr.mxu0 %v1877
        %1972 = vmatpush2.msra.mxu0 %v1853
        %1973 = vmatprep.mubr.f32.mxu0 %v1886
        %1974 = vmatmul.mubr.f32.gmra.mxu0 %v1725
        %v1975 = vpop.f32.mrf.mxu0
        %v1976 = vadd.f32 0.0, %v1975
        %v1977 = vpop.f32.mrf.mxu0
        %v1978 = vadd.f32 0.0, %v1977
        %1979 = vmatprep.mubr.f32.mxu0 %v1889
        %1980 = vmatmul.mubr.f32.gmra.mxu0 %v1727
        %v1981 = vpop.f32.mrf.mxu0
        %v1982 = vadd.f32 0.0, %v1981
        %v1983 = vpop.f32.mrf.mxu0
        %v1984 = vadd.f32 0.0, %v1983
        %1985 = vmatprep.mubr.f32.mxu0 %v1892
        %1986 = vmatmul.mubr.f32.gmra.mxu0 %v1729
        %v1987 = vpop.f32.mrf.mxu0
        %v1988 = vadd.f32 0.0, %v1987
        %v1989 = vpop.f32.mrf.mxu0
        %v1990 = vadd.f32 0.0, %v1989
        %1991 = vmatprep.mubr.f32.mxu0 %v1895
        %1992 = vmatmul.mubr.f32.gmra.mxu0 %v1731
        %v1993 = vpop.f32.mrf.mxu0
        %v1994 = vadd.f32 0.0, %v1993
        %v1995 = vpop.f32.mrf.mxu0
        %v1996 = vadd.f32 0.0, %v1995
        %1997 = vmatprep.mubr.f32.mxu0 %v1898
        %1998 = vmatmul.mubr.f32.gmra.mxu0 %v1733
        %v1999 = vpop.f32.mrf.mxu0
        %v2000 = vadd.f32 0.0, %v1999
        %v2001 = vpop.f32.mrf.mxu0
        %v2002 = vadd.f32 0.0, %v2001
        %2003 = vmatprep.mubr.f32.mxu0 %v1901
        %2004 = vmatmul.mubr.f32.gmra.mxu0 %v1735
        %v2005 = vpop.f32.mrf.mxu0
        %v2006 = vadd.f32 0.0, %v2005
        %v2007 = vpop.f32.mrf.mxu0
        %v2008 = vadd.f32 0.0, %v2007
        %2009 = vmatprep.mubr.f32.mxu0 %v1904
        %2010 = vmatmul.mubr.f32.gmra.mxu0 %v1737
        %v2011 = vpop.f32.mrf.mxu0
        %v2012 = vadd.f32 0.0, %v2011
        %v2013 = vpop.f32.mrf.mxu0
        %v2014 = vadd.f32 0.0, %v2013
        %2015 = vmatprep.mubr.f32.mxu0 %v1907
        %2016 = vmatmul.mubr.f32.gmra.mxu0 %v1739
        %v2017 = vpop.f32.mrf.mxu0
        %v2018 = vadd.f32 0.0, %v2017
        %v2019 = vpop.f32.mrf.mxu0
        %v2020 = vadd.f32 0.0, %v2019
        %2021 = vdwg.mxu0
        %v2022 = vadd.f32 %v1678, %v1976
        %v2023 = vadd.f32 %v1680, %v1978
        %v2024 = vadd.f32 %v1684, %v1982
        %v2025 = vadd.f32 %v1686, %v1984
        %v2026 = vadd.f32 %v1690, %v1988
        %v2027 = vadd.f32 %v1692, %v1990
        %v2028 = vadd.f32 %v1696, %v1994
        %v2029 = vadd.f32 %v1698, %v1996
        %v2030 = vadd.f32 %v1702, %v2000
        %v2031 = vadd.f32 %v1704, %v2002
        %v2032 = vadd.f32 %v1708, %v2006
        %v2033 = vadd.f32 %v1710, %v2008
        %v2034 = vadd.f32 %v1714, %v2012
        %v2035 = vadd.f32 %v1716, %v2014
        %v2036 = vadd.f32 %v1720, %v2018
        %v2037 = vadd.f32 %v1722, %v2020
        %v2038 = vld [vmem:[%s4] sm:$0xff]
        %v2039 = vld [vmem:[%s4 + $0x8] sm:$0xff]
        %v2040 = vld [vmem:[%s4 + $0x10] sm:$0xff]
        %v2041 = vld [vmem:[%s4 + $0x18] sm:$0xff]
        %v2042 = vld [vmem:[%s4 + $0x20] sm:$0xff]
        %v2043 = vld [vmem:[%s4 + $0x28] sm:$0xff]
        %v2044 = vld [vmem:[%s4 + $0x30] sm:$0xff]
        %v2045 = vld [vmem:[%s4 + $0x38] sm:$0xff]
        %2047 = vset.pattern.permute.xlu0 0
        %2048 = vperm.xlu0 %2047, %v2038
        %v2049 = vpop.permute.xlu0 %2048
        %2052 = vset.pattern.permute.xlu0 0
        %2053 = vperm.xlu0 %2052, %v2039
        %v2054 = vpop.permute.xlu0 %2053
        %2057 = vset.pattern.permute.xlu0 0
        %2058 = vperm.xlu0 %2057, %v2040
        %v2059 = vpop.permute.xlu0 %2058
        %2062 = vset.pattern.permute.xlu0 0
        %2063 = vperm.xlu0 %2062, %v2041
        %v2064 = vpop.permute.xlu0 %2063
        %2067 = vset.pattern.permute.xlu0 0
        %2068 = vperm.xlu0 %2067, %v2042
        %v2069 = vpop.permute.xlu0 %2068
        %2072 = vset.pattern.permute.xlu0 0
        %2073 = vperm.xlu0 %2072, %v2043
        %v2074 = vpop.permute.xlu0 %2073
        %2077 = vset.pattern.permute.xlu0 0
        %2078 = vperm.xlu0 %2077, %v2044
        %v2079 = vpop.permute.xlu0 %2078
        %2082 = vset.pattern.permute.xlu0 0
        %2083 = vperm.xlu0 %2082, %v2045
        %v2084 = vpop.permute.xlu0 %2083
        %v2086 = vadd.f32 %v2022, %v2049
        %v2087 = vadd.f32 %v2023, %v2049
        %v2088 = vadd.f32 %v2024, %v2054
        %v2089 = vadd.f32 %v2025, %v2054
        %v2090 = vadd.f32 %v2026, %v2059
        %v2091 = vadd.f32 %v2027, %v2059
        %v2092 = vadd.f32 %v2028, %v2064
        %v2093 = vadd.f32 %v2029, %v2064
        %v2094 = vadd.f32 %v2030, %v2069
        %v2095 = vadd.f32 %v2031, %v2069
        %v2096 = vadd.f32 %v2032, %v2074
        %v2097 = vadd.f32 %v2033, %v2074
        %v2098 = vadd.f32 %v2034, %v2079
        %v2099 = vadd.f32 %v2035, %v2079
        %v2100 = vadd.f32 %v2036, %v2084
        %v2101 = vadd.f32 %v2037, %v2084
        %v2102 = vtanh.pop %v2086
        %v2103 = vtanh.pop %v2087
        %v2104 = vtanh.pop %v2088
        %v2105 = vtanh.pop %v2089
        %v2106 = vtanh.pop %v2090
        %v2107 = vtanh.pop %v2091
        %v2108 = vtanh.pop %v2092
        %v2109 = vtanh.pop %v2093
        %v2110 = vtanh.pop %v2094
        %v2111 = vtanh.pop %v2095
        %v2112 = vtanh.pop %v2096
        %v2113 = vtanh.pop %v2097
        %v2114 = vtanh.pop %v2098
        %v2115 = vtanh.pop %v2099
        %v2116 = vtanh.pop %v2100
        %v2117 = vtanh.pop %v2101
        %v2118 = vld [vmem:[%s5] sm:$0x3]
        %v2119 = vld [vmem:[%s6] sm:$0x3]
        %2121 = vset.pattern.permute.xlu0 0
        %2122 = vperm.xlu0 %2121, %v2119
        %v2123 = vpop.permute.xlu0 %2122
        %v2126 = vsel %vm1449, %v2118, 0
        %2128 = vmatprep.subr.mxu0 0.0
        %2129 = vmatpush1.msra.mxu0 0.0
        %2130 = vmatprep.subr.mxu0 0.0
        %2131 = vmatpush1.msra.mxu0 0.0
        %2132 = vmatprep.subr.mxu0 0.0
        %2133 = vmatpush1.msra.mxu0 0.0
        %2134 = vmatprep.subr.mxu0 0.0
        %2135 = vmatpush1.msra.mxu0 0.0
        %2136 = vmatprep.subr.mxu0 0.0
        %2137 = vmatpush1.msra.mxu0 0.0
        %2138 = vmatprep.subr.mxu0 0.0
        %2139 = vmatpush1.msra.mxu0 0.0
        %2140 = vmatprep.subr.mxu0 0.0
        %2141 = vmatpush1.msra.mxu0 0.0
        %2142 = vmatprep.subr.mxu0 0.0
        %2143 = vmatpush1.msra.mxu0 0.0
        %2144 = vmatprep.subr.mxu0 %v2117
        %2145 = vmatpush1.msra.mxu0 %v2116
        %2146 = vmatprep.subr.mxu0 %v2115
        %2147 = vmatpush1.msra.mxu0 %v2114
        %2148 = vmatprep.subr.mxu0 %v2113
        %2149 = vmatpush1.msra.mxu0 %v2112
        %2150 = vmatprep.subr.mxu0 %v2111
        %2151 = vmatpush1.msra.mxu0 %v2110
        %2152 = vmatprep.subr.mxu0 %v2109
        %2153 = vmatpush1.msra.mxu0 %v2108
        %2154 = vmatprep.subr.mxu0 %v2107
        %2155 = vmatpush1.msra.mxu0 %v2106
        %2156 = vmatprep.subr.mxu0 %v2105
        %2157 = vmatpush1.msra.mxu0 %v2104
        %2158 = vmatprep.subr.mxu0 %v2103
        %2159 = vmatpush1.msra.mxu0 %v2102
        %2160 = vmatprep.subr.mxu0 0.0
        %2161 = vmatpush2.msra.mxu0 0.0
        %2162 = vmatprep.subr.mxu0 0.0
        %2163 = vmatpush2.msra.mxu0 0.0
        %2164 = vmatprep.subr.mxu0 0.0
        %2165 = vmatpush2.msra.mxu0 0.0
        %2166 = vmatprep.subr.mxu0 0.0
        %2167 = vmatpush2.msra.mxu0 0.0
        %2168 = vmatprep.subr.mxu0 0.0
        %2169 = vmatpush2.msra.mxu0 0.0
        %2170 = vmatprep.subr.mxu0 0.0
        %2171 = vmatpush2.msra.mxu0 0.0
        %2172 = vmatprep.subr.mxu0 0.0
        %2173 = vmatpush2.msra.mxu0 0.0
        %2174 = vmatprep.subr.mxu0 0.0
        %2175 = vmatpush2.msra.mxu0 0.0
        %2176 = vmatprep.subr.mxu0 0.0
        %2177 = vmatpush2.msra.mxu0 0.0
        %2178 = vmatprep.subr.mxu0 0.0
        %2179 = vmatpush2.msra.mxu0 0.0
        %2180 = vmatprep.subr.mxu0 0.0
        %2181 = vmatpush2.msra.mxu0 0.0
        %2182 = vmatprep.subr.mxu0 0.0
        %2183 = vmatpush2.msra.mxu0 0.0
        %2184 = vmatprep.subr.mxu0 0.0
        %2185 = vmatpush2.msra.mxu0 0.0
        %2186 = vmatprep.subr.mxu0 0.0
        %2187 = vmatpush2.msra.mxu0 0.0
        %2188 = vmatprep.subr.mxu0 0.0
        %2189 = vmatpush2.msra.mxu0 0.0
        %2190 = vmatprep.subr.mxu0 0.0
        %2191 = vmatpush2.msra.mxu0 0.0
        %2192 = vmatprep.mubr.f32.mxu0 0.0
        %2193 = vmatmul.mubr.f32.gmra.mxu0 %v2126
        %v2194 = vpop.f32.mrf.mxu0
        %v2195 = vadd.f32 %v2123, %v2194
        %v2196 = vpop.f32.mrf.mxu0
        %v2197 = vadd.f32 %v2123, %v2196
        %2198 = vdwg.mxu0
        %v2199 = vtanh.pop %v2195
        %v2200 = vtanh.pop %v2197
        %v2201 = vadd.f32 %v2199, %v326
        %v2202 = vadd.f32 %v2200, %v327
        %v2205 = vcombine.low %v2201, %v2202
        %v2207 = vunpack.c.l.s4 1983009808
        %v2208 = vunpack.c.0.s8 %v2207
        %v2209 = vlaneseq
        %v2210 = vshrl.u32 %v2209, 7
        %v2211 = vsub.s32 %v2208, %v2210
        %v2212 = vrot.slane %v2205, %v2211
        %2214 = vst [vmem:[%s294] sm:$0xf] %v2212
        %s2215 = sand.u32 %s184, 1
        %s2216 = scalar_lea.sflag [#allocation6], %s2215
        %s2217 = sand.u32 %s184, 1
        %s2218 = smul.addr %s2217, 4
        %s2219 = scalar_lea.vmem [#allocation7], %s2218
        // Predicated region
        $region53: #{tpu_custom_call.1} parent=47 // pred_check
          %p2220 = pneg %p194
        $region54: #{tpu_custom_call.1} parent=47 // pred_check_branch
          %2222 = sbr.rel (%p2220) target = $region56
        $region55: #{tpu_custom_call.1} parent=47 // pred_region
          %s2224 = ssub.s32 64, 64
          %2225 = vsyncadd %s2216, %s2224
          %s2226 = smul.addr %s24, 2
          %s2227 = smul.addr %s2226, 32
          %s2228 = scalar_lea.hbm %s7, %s2227
          %s2230 = sshll.u32 %s2219, 4
          %s2231 = int_to_ptr.vmem [resolvable:$true] %s2230
          %2233 = dma.vmem_to_hbm [thread:$0]  %s2231, 64, %s2228, %s2216
        $region56: #{tpu_custom_call.1} parent=47 // pred_fallthru
          _
      $region48: #{tpu_custom_call.1} parent=5 // pred_fallthru
        _
      %p2234 = scmp.le.s32.totalorder 2, %s19
      // Predicated region
      $region57: #{tpu_custom_call.1} parent=5 // pred_check
        %p2235 = pneg %p2234
      $region58: #{tpu_custom_call.1} parent=5 // pred_check_branch
        %2237 = sbr.rel (%p2235) target = $region60
      $region59: #{tpu_custom_call.1} parent=5 // pred_region
        %s2238 = ssub.s32 %s19, 2
        // Predicated region
        $region61: #{tpu_custom_call.1} parent=59 // pred_check
          %p2239 = pneg %p200
        $region62: #{tpu_custom_call.1} parent=59 // pred_check_branch
          %2241 = sbr.rel (%p2239) target = $region64
        $region63: #{tpu_custom_call.1} parent=59 // pred_region
          %s2242 = sand.u32 %s185, 1
          %s2243 = scalar_lea.sflag [#allocation6], %s2242
          %s2244 = sand.u32 %s185, 1
          %s2245 = smul.addr %s2244, 4
          %s2246 = scalar_lea.vmem [#allocation7], %s2245
          %2247 = dma.done %s2243, 64
        $region64: #{tpu_custom_call.1} parent=59 // pred_fallthru
          _
      $region60: #{tpu_custom_call.1} parent=5 // pred_fallthru
        _
    $region6: #{tpu_custom_call.1} parent=1 // loop_footer
      %s23 = sadd.s32 1, %s19
    $region7: #{tpu_custom_call.1} parent=1 // loop_footer_branch
      %18 = sbr.rel target = $region3
    $region8: #{tpu_custom_call.1} parent=1 // loop_exit
      _
    %2248 = vsyncpa [#allocation5], 1
    %s2249 = scalar_lea.sflag [#allocation5], 1
    %2250 = vsyncpa %s2249, 1
    %2251 = vsyncpa [#allocation6], 1
    %s2252 = scalar_lea.sflag [#allocation6], 1
    %2253 = vsyncpa %s2252, 1

</llo_original>
